<compile_context>
chip_gen: v6e
topology: v6e:2x2x1
jax: 0.10.0
libtpu: 0.0.40
codegen_flags: <defaults>
</compile_context>

<pallas_src>
import functools
import numpy as np
import jax
import jax.numpy as jnp
from jax import lax
from jax.experimental import pallas as pl
from jax.experimental.pallas import tpu as pltpu

EPS = 1e-5


# ------------------------- trace-time geometry plan ------------------------- #
def _plan(H, W):
    """Flat padded-frame geometry + reflection region code (numpy, trace-time)."""
    Hp, Wp = H + 2, W + 2
    Pf = Hp * Wp                                   # valid positions per frame
    Lf = -(-Pf // 128) * 128                       # lane-dense frame length
    d_list = (0, 2, -2)                            # reflection source deltas
    refl_offs = [di * Wp + dj for di in d_list for dj in d_list]
    conv_offs = [dy * Wp + dx for dy in (-1, 0, 1) for dx in (-1, 0, 1)]
    # region code: 0 = interior, 1..8 = border regions (reflect from
    # p + refl_offs[r]), 9 = lane-padding tail (never interior, never filled).
    code = np.full((1, Lf), 9, np.int32)
    for i in range(Hp):
        di = 2 if i == 0 else (-2 if i == Hp - 1 else 0)
        for j in range(Wp):
            dj = 2 if j == 0 else (-2 if j == Wp - 1 else 0)
            code[0, i * Wp + j] = d_list.index(di) * 3 + d_list.index(dj)
    return Hp, Wp, Pf, Lf, refl_offs, conv_offs, code


# ------------------------------ fused kernel -------------------------------- #
def _res_block_kernel(code_ref, x_ref, w1_ref, gb1_ref, w2_ref, gb2_ref,
                      o_ref, stack_ref, *, N, C, Lf, conv_offs, refl_offs,
                      inv_cnt):
    R = N * C
    code = code_ref[...]                            # (1, Lf) int32 region id
    regs = [code == r for r in range(9)]            # rebuilt masks (VPU compares)
    x = x_ref[...]                                  # (R, Lf) packed padded frames

    def shift(t, off):                              # out[., p] = t[., p + off]
        return t if off == 0 else pltpu.roll(t, (-off) % Lf, axis=1)

    def reflect_fill(t):                            # ReflectionPad2d(1): 8 lane rolls
        out = jnp.where(regs[0], t, 0.0)            # tail (code 9) stays zero
        for r in range(1, 9):
            out = jnp.where(regs[r], shift(t, refl_offs[r]), out)
        return out

    def conv3x3(tp, w_ref):                         # 9-tap stack + ONE MXU dot
        for k, off in enumerate(conv_offs):
            stack_ref[k * R:(k + 1) * R, :] = shift(tp, off)
        return jnp.dot(w_ref[...], stack_ref[...],
                       preferred_element_type=jnp.float32)

    def batch_fold(t):                              # sum rows of the same channel
        tot = t
        for n in range(1, N):
            tot = tot + pltpu.roll(t, (n * C) % R, axis=0)
        return tot

    def bn(a, gb_ref, relu):                        # training BatchNorm2d, one pass
        ai = jnp.where(regs[0], a, 0.0)             # stats over interior only
        mean = jnp.sum(batch_fold(ai), axis=1, keepdims=True) * inv_cnt
        msq = jnp.sum(batch_fold(ai * a), axis=1, keepdims=True) * inv_cnt
        var = msq - mean * mean
        out = (a - mean) * lax.rsqrt(var + EPS) * gb_ref[:, 0:1] + gb_ref[:, 1:2]
        return jnp.maximum(out, 0.0) if relu else out

    y1 = bn(conv3x3(reflect_fill(x), w1_ref), gb1_ref, relu=True)   # pad+conv1+bn1+relu
    z = bn(conv3x3(reflect_fill(y1), w2_ref), gb2_ref, relu=False)  # pad+conv2+bn2
    o_ref[...] = (x + z).astype(o_ref.dtype)        # residual; only interior is used


# -------------------------------- JAX wrapper -------------------------------- #
def _fuse_conv_weight(w_oihw, N):
    """(C,C,3,3) OIHW -> batch-block-diagonal (N*C, 9*N*C) matched to stack rows."""
    C = w_oihw.shape[0]
    w9 = jnp.transpose(w_oihw, (2, 3, 1, 0)).reshape(9, C, C)    # [k, ci, co]
    eye = jnp.eye(N, dtype=w_oihw.dtype)
    blocks = [jnp.kron(eye, w9[k].T) for k in range(9)]          # (N*C, N*C) each
    return jnp.concatenate(blocks, axis=1)                       # (N*C, 9*N*C)


@jax.jit
def res_block(x, params):
    N, C, H, W = x.shape
    Hp, Wp, Pf, Lf, refl_offs, conv_offs, code = _plan(H, W)
    R = N * C

    # pack NCHW into (N*C, Lf): one zero-bordered padded frame per sublane row.
    xt = jnp.pad(x, ((0, 0), (0, 0), (1, 1), (1, 1))).reshape(R, Pf)
    xt = jnp.pad(xt, ((0, 0), (0, Lf - Pf)))
    # TODO(synk): for chained ResBlocks, keep this packed (N*C, Lf) layout between
    # blocks instead of converting NCHW <-> packed around every block.

    w1 = _fuse_conv_weight(params["w1"], N)
    w2 = _fuse_conv_weight(params["w2"], N)
    gb1 = jnp.tile(jnp.stack([params["g1"], params["be1"]], axis=1), (N, 1))  # (R, 2)
    gb2 = jnp.tile(jnp.stack([params["g2"], params["be2"]], axis=1), (N, 1))
    # conv biases b1/b2 are dropped: training-mode BN subtracts the mean -> exact cancel.

    kernel = functools.partial(
        _res_block_kernel, N=N, C=C, Lf=Lf, conv_offs=conv_offs,
        refl_offs=refl_offs, inv_cnt=1.0 / float(N * H * W))

    vmem = pl.BlockSpec(memory_space=pltpu.MemorySpace.VMEM)
    out = pl.pallas_call(
        kernel,
        out_shape=jax.ShapeDtypeStruct((R, Lf), x.dtype),
        in_specs=[vmem] * 6,
        out_specs=vmem,
        scratch_shapes=[pltpu.VMEM((9 * R, Lf), jnp.float32)],   # 9-tap conv stack
    )(jnp.asarray(code), xt, w1, gb1, w2, gb2)

    # unpack interior back to NCHW (border/tail lanes of the raw output are junk)
    return out[:, :Pf].reshape(N, C, Hp, Wp)[:, :, 1:H + 1, 1:W + 1]


# ----------------------------- pure-JAX reference ---------------------------- #
def _reflect_pad(x):
    return jnp.pad(x, ((0, 0), (0, 0), (1, 1), (1, 1)), mode="reflect")


def _bn_train(y, g, b):
    mean = jnp.mean(y, axis=(0, 2, 3), keepdims=True)
    var = jnp.mean((y - mean) ** 2, axis=(0, 2, 3), keepdims=True)
    return ((y - mean) * lax.rsqrt(var + EPS) * g.reshape(1, -1, 1, 1)
            + b.reshape(1, -1, 1, 1))


def _ref_forward(x, p):
    dn = ("NCHW", "OIHW", "NCHW")
    y = lax.conv_general_dilated(_reflect_pad(x), p["w1"], (1, 1), "VALID",
                                 dimension_numbers=dn) + p["b1"].reshape(1, -1, 1, 1)
    y = jnp.maximum(_bn_train(y, p["g1"], p["be1"]), 0.0)
    z = lax.conv_general_dilated(_reflect_pad(y), p["w2"], (1, 1), "VALID",
                                 dimension_numbers=dn) + p["b2"].reshape(1, -1, 1, 1)
    return x + _bn_train(z, p["g2"], p["be2"])


# ------------------------------------ main ----------------------------------- #
if __name__ == "__main__":
    key = jax.random.PRNGKey(0)
    N, C, H, W = 2, 4, 16, 16          # NCHW, matches PyTorch ResBlock(planes=4)
    kx, kw1, kb1, kw2, kb2 = jax.random.split(key, 5)

    x = jax.random.normal(kx, (N, C, H, W), jnp.float32)
    bound = 1.0 / float(np.sqrt(C * 3 * 3))   # PyTorch Conv2d default init scale
    params = {
        "w1": jax.random.uniform(kw1, (C, C, 3, 3), jnp.float32, -bound, bound),
        "b1": jax.random.uniform(kb1, (C,), jnp.float32, -bound, bound),
        "g1": jnp.ones((C,), jnp.float32),    # BatchNorm2d default weight
        "be1": jnp.zeros((C,), jnp.float32),  # BatchNorm2d default bias
        "w2": jax.random.uniform(kw2, (C, C, 3, 3), jnp.float32, -bound, bound),
        "b2": jax.random.uniform(kb2, (C,), jnp.float32, -bound, bound),
        "g2": jnp.ones((C,), jnp.float32),
        "be2": jnp.zeros((C,), jnp.float32),
    }

    out = jax.block_until_ready(res_block(x, params))
    ref = _ref_forward(x, params)
    assert out.shape == x.shape and out.dtype == x.dtype
    err = float(jnp.max(jnp.abs(out - ref)))
    assert jnp.allclose(out, ref, atol=2e-4, rtol=2e-4), f"max abs err {err}"
    print("KERNEL_OK")
</pallas_src>

<mosaic_0001>
module attributes {stable_mosaic.version = 11 : i64} {
  func.func @_res_block_kernel(%arg0: memref<1x384xi32, #tpu.memory_space<vmem>>, %arg1: memref<8x384xf32, #tpu.memory_space<vmem>>, %arg2: memref<8x72xf32, #tpu.memory_space<vmem>>, %arg3: memref<8x2xf32, #tpu.memory_space<vmem>>, %arg4: memref<8x72xf32, #tpu.memory_space<vmem>>, %arg5: memref<8x2xf32, #tpu.memory_space<vmem>>, %arg6: memref<8x384xf32, #tpu.memory_space<vmem>>, %arg7: memref<72x384xf32, #tpu.memory_space<vmem>>) attributes {dimension_semantics = [], scalar_prefetch = 0 : i64, scratch_operands = 1 : i64, tpu.core_type = #tpu.core_type<tc>} {
    %c0 = arith.constant 0 : index
    %c0_0 = arith.constant 0 : index
    %0 = vector.load %arg0[%c0, %c0_0] : memref<1x384xi32, #tpu.memory_space<vmem>>, vector<1x384xi32>
    %c0_i32 = arith.constant 0 : i32
    %1 = vector.broadcast %c0_i32 : i32 to vector<1x384xi32>
    %2 = arith.cmpi eq, %0, %1 : vector<1x384xi32>
    %c1_i32 = arith.constant 1 : i32
    %3 = vector.broadcast %c1_i32 : i32 to vector<1x384xi32>
    %4 = arith.cmpi eq, %0, %3 : vector<1x384xi32>
    %c2_i32 = arith.constant 2 : i32
    %5 = vector.broadcast %c2_i32 : i32 to vector<1x384xi32>
    %6 = arith.cmpi eq, %0, %5 : vector<1x384xi32>
    %c3_i32 = arith.constant 3 : i32
    %7 = vector.broadcast %c3_i32 : i32 to vector<1x384xi32>
    %8 = arith.cmpi eq, %0, %7 : vector<1x384xi32>
    %c4_i32 = arith.constant 4 : i32
    %9 = vector.broadcast %c4_i32 : i32 to vector<1x384xi32>
    %10 = arith.cmpi eq, %0, %9 : vector<1x384xi32>
    %c5_i32 = arith.constant 5 : i32
    %11 = vector.broadcast %c5_i32 : i32 to vector<1x384xi32>
    %12 = arith.cmpi eq, %0, %11 : vector<1x384xi32>
    %c6_i32 = arith.constant 6 : i32
    %13 = vector.broadcast %c6_i32 : i32 to vector<1x384xi32>
    %14 = arith.cmpi eq, %0, %13 : vector<1x384xi32>
    %c7_i32 = arith.constant 7 : i32
    %15 = vector.broadcast %c7_i32 : i32 to vector<1x384xi32>
    %16 = arith.cmpi eq, %0, %15 : vector<1x384xi32>
    %c8_i32 = arith.constant 8 : i32
    %17 = vector.broadcast %c8_i32 : i32 to vector<1x384xi32>
    %18 = arith.cmpi eq, %0, %17 : vector<1x384xi32>
    %c0_1 = arith.constant 0 : index
    %c0_2 = arith.constant 0 : index
    %19 = vector.load %arg1[%c0_1, %c0_2] : memref<8x384xf32, #tpu.memory_space<vmem>>, vector<8x384xf32>
    %cst = arith.constant 0.000000e+00 : f32
    %20 = vector.shape_cast %2 : vector<1x384xi1> to vector<1x384xi1>
    %21 = vector.broadcast %20 : vector<1x384xi1> to vector<8x384xi1>
    %22 = vector.broadcast %cst : f32 to vector<8x384xf32>
    %23 = arith.select %21, %19, %22 : vector<8x384xi1>, vector<8x384xf32>
    %c382_i32 = arith.constant 382 : i32
    %24 = tpu.dynamic_rotate %19 by %c382_i32 dim 1 : vector<8x384xf32>, i32 -> vector<8x384xf32>
    %25 = vector.shape_cast %4 : vector<1x384xi1> to vector<1x384xi1>
    %26 = vector.broadcast %25 : vector<1x384xi1> to vector<8x384xi1>
    %27 = arith.select %26, %24, %23 : vector<8x384xi1>, vector<8x384xf32>
    %c2_i32_3 = arith.constant 2 : i32
    %28 = tpu.dynamic_rotate %19 by %c2_i32_3 dim 1 : vector<8x384xf32>, i32 -> vector<8x384xf32>
    %29 = vector.shape_cast %6 : vector<1x384xi1> to vector<1x384xi1>
    %30 = vector.broadcast %29 : vector<1x384xi1> to vector<8x384xi1>
    %31 = arith.select %30, %28, %27 : vector<8x384xi1>, vector<8x384xf32>
    %c348_i32 = arith.constant 348 : i32
    %32 = tpu.dynamic_rotate %19 by %c348_i32 dim 1 : vector<8x384xf32>, i32 -> vector<8x384xf32>
    %33 = vector.shape_cast %8 : vector<1x384xi1> to vector<1x384xi1>
    %34 = vector.broadcast %33 : vector<1x384xi1> to vector<8x384xi1>
    %35 = arith.select %34, %32, %31 : vector<8x384xi1>, vector<8x384xf32>
    %c346_i32 = arith.constant 346 : i32
    %36 = tpu.dynamic_rotate %19 by %c346_i32 dim 1 : vector<8x384xf32>, i32 -> vector<8x384xf32>
    %37 = vector.shape_cast %10 : vector<1x384xi1> to vector<1x384xi1>
    %38 = vector.broadcast %37 : vector<1x384xi1> to vector<8x384xi1>
    %39 = arith.select %38, %36, %35 : vector<8x384xi1>, vector<8x384xf32>
    %c350_i32 = arith.constant 350 : i32
    %40 = tpu.dynamic_rotate %19 by %c350_i32 dim 1 : vector<8x384xf32>, i32 -> vector<8x384xf32>
    %41 = vector.shape_cast %12 : vector<1x384xi1> to vector<1x384xi1>
    %42 = vector.broadcast %41 : vector<1x384xi1> to vector<8x384xi1>
    %43 = arith.select %42, %40, %39 : vector<8x384xi1>, vector<8x384xf32>
    %c36_i32 = arith.constant 36 : i32
    %44 = tpu.dynamic_rotate %19 by %c36_i32 dim 1 : vector<8x384xf32>, i32 -> vector<8x384xf32>
    %45 = vector.shape_cast %14 : vector<1x384xi1> to vector<1x384xi1>
    %46 = vector.broadcast %45 : vector<1x384xi1> to vector<8x384xi1>
    %47 = arith.select %46, %44, %43 : vector<8x384xi1>, vector<8x384xf32>
    %c34_i32 = arith.constant 34 : i32
    %48 = tpu.dynamic_rotate %19 by %c34_i32 dim 1 : vector<8x384xf32>, i32 -> vector<8x384xf32>
    %49 = vector.shape_cast %16 : vector<1x384xi1> to vector<1x384xi1>
    %50 = vector.broadcast %49 : vector<1x384xi1> to vector<8x384xi1>
    %51 = arith.select %50, %48, %47 : vector<8x384xi1>, vector<8x384xf32>
    %c38_i32 = arith.constant 38 : i32
    %52 = tpu.dynamic_rotate %19 by %c38_i32 dim 1 : vector<8x384xf32>, i32 -> vector<8x384xf32>
    %53 = vector.shape_cast %18 : vector<1x384xi1> to vector<1x384xi1>
    %54 = vector.broadcast %53 : vector<1x384xi1> to vector<8x384xi1>
    %55 = arith.select %54, %52, %51 : vector<8x384xi1>, vector<8x384xf32>
    %c19_i32 = arith.constant 19 : i32
    %56 = tpu.dynamic_rotate %55 by %c19_i32 dim 1 : vector<8x384xf32>, i32 -> vector<8x384xf32>
    %c0_4 = arith.constant 0 : index
    %c0_5 = arith.constant 0 : index
    %57 = vector.load %arg7[%c0_4, %c0_5] : memref<72x384xf32, #tpu.memory_space<vmem>>, vector<8x384xf32>
    tpu.vector_store %arg7[%c0_4, %c0_5], %56 {strides = array<i32>} : memref<72x384xf32, #tpu.memory_space<vmem>>, vector<8x384xf32>,
    %c18_i32 = arith.constant 18 : i32
    %58 = tpu.dynamic_rotate %55 by %c18_i32 dim 1 : vector<8x384xf32>, i32 -> vector<8x384xf32>
    %c8 = arith.constant 8 : index
    %c0_6 = arith.constant 0 : index
    %59 = vector.load %arg7[%c8, %c0_6] : memref<72x384xf32, #tpu.memory_space<vmem>>, vector<8x384xf32>
    tpu.vector_store %arg7[%c8, %c0_6], %58 {strides = array<i32>} : memref<72x384xf32, #tpu.memory_space<vmem>>, vector<8x384xf32>,
    %c17_i32 = arith.constant 17 : i32
    %60 = tpu.dynamic_rotate %55 by %c17_i32 dim 1 : vector<8x384xf32>, i32 -> vector<8x384xf32>
    %c16 = arith.constant 16 : index
    %c0_7 = arith.constant 0 : index
    %61 = vector.load %arg7[%c16, %c0_7] : memref<72x384xf32, #tpu.memory_space<vmem>>, vector<8x384xf32>
    tpu.vector_store %arg7[%c16, %c0_7], %60 {strides = array<i32>} : memref<72x384xf32, #tpu.memory_space<vmem>>, vector<8x384xf32>,
    %c1_i32_8 = arith.constant 1 : i32
    %62 = tpu.dynamic_rotate %55 by %c1_i32_8 dim 1 : vector<8x384xf32>, i32 -> vector<8x384xf32>
    %c24 = arith.constant 24 : index
    %c0_9 = arith.constant 0 : index
    %63 = vector.load %arg7[%c24, %c0_9] : memref<72x384xf32, #tpu.memory_space<vmem>>, vector<8x384xf32>
    tpu.vector_store %arg7[%c24, %c0_9], %62 {strides = array<i32>} : memref<72x384xf32, #tpu.memory_space<vmem>>, vector<8x384xf32>,
    %c32 = arith.constant 32 : index
    %c0_10 = arith.constant 0 : index
    %64 = vector.load %arg7[%c32, %c0_10] : memref<72x384xf32, #tpu.memory_space<vmem>>, vector<8x384xf32>
    tpu.vector_store %arg7[%c32, %c0_10], %55 {strides = array<i32>} : memref<72x384xf32, #tpu.memory_space<vmem>>, vector<8x384xf32>,
    %c383_i32 = arith.constant 383 : i32
    %65 = tpu.dynamic_rotate %55 by %c383_i32 dim 1 : vector<8x384xf32>, i32 -> vector<8x384xf32>
    %c40 = arith.constant 40 : index
    %c0_11 = arith.constant 0 : index
    %66 = vector.load %arg7[%c40, %c0_11] : memref<72x384xf32, #tpu.memory_space<vmem>>, vector<8x384xf32>
    tpu.vector_store %arg7[%c40, %c0_11], %65 {strides = array<i32>} : memref<72x384xf32, #tpu.memory_space<vmem>>, vector<8x384xf32>,
    %c367_i32 = arith.constant 367 : i32
    %67 = tpu.dynamic_rotate %55 by %c367_i32 dim 1 : vector<8x384xf32>, i32 -> vector<8x384xf32>
    %c48 = arith.constant 48 : index
    %c0_12 = arith.constant 0 : index
    %68 = vector.load %arg7[%c48, %c0_12] : memref<72x384xf32, #tpu.memory_space<vmem>>, vector<8x384xf32>
    tpu.vector_store %arg7[%c48, %c0_12], %67 {strides = array<i32>} : memref<72x384xf32, #tpu.memory_space<vmem>>, vector<8x384xf32>,
    %c366_i32 = arith.constant 366 : i32
    %69 = tpu.dynamic_rotate %55 by %c366_i32 dim 1 : vector<8x384xf32>, i32 -> vector<8x384xf32>
    %c56 = arith.constant 56 : index
    %c0_13 = arith.constant 0 : index
    %70 = vector.load %arg7[%c56, %c0_13] : memref<72x384xf32, #tpu.memory_space<vmem>>, vector<8x384xf32>
    tpu.vector_store %arg7[%c56, %c0_13], %69 {strides = array<i32>} : memref<72x384xf32, #tpu.memory_space<vmem>>, vector<8x384xf32>,
    %c365_i32 = arith.constant 365 : i32
    %71 = tpu.dynamic_rotate %55 by %c365_i32 dim 1 : vector<8x384xf32>, i32 -> vector<8x384xf32>
    %c64 = arith.constant 64 : index
    %c0_14 = arith.constant 0 : index
    %72 = vector.load %arg7[%c64, %c0_14] : memref<72x384xf32, #tpu.memory_space<vmem>>, vector<8x384xf32>
    tpu.vector_store %arg7[%c64, %c0_14], %71 {strides = array<i32>} : memref<72x384xf32, #tpu.memory_space<vmem>>, vector<8x384xf32>,
    %c0_15 = arith.constant 0 : index
    %c0_16 = arith.constant 0 : index
    %73 = vector.load %arg2[%c0_15, %c0_16] : memref<8x72xf32, #tpu.memory_space<vmem>>, vector<8x72xf32>
    %c0_17 = arith.constant 0 : index
    %c0_18 = arith.constant 0 : index
    %74 = vector.load %arg7[%c0_17, %c0_18] : memref<72x384xf32, #tpu.memory_space<vmem>>, vector<72x384xf32>
    %cst_19 = arith.constant dense<0.000000e+00> : vector<8x384xf32>
    %75 = tpu.matmul %73, %74, %cst_19 {dimension_numbers = #tpu.dot_dimension_numbers<[1], [0], [0], [1], [0, 0, 1, 1], [], []>} : vector<8x72xf32>, vector<72x384xf32>, vector<8x384xf32> -> vector<8x384xf32>
    %cst_20 = arith.constant 0.000000e+00 : f32
    %76 = vector.shape_cast %2 : vector<1x384xi1> to vector<1x384xi1>
    %77 = vector.broadcast %76 : vector<1x384xi1> to vector<8x384xi1>
    %78 = vector.broadcast %cst_20 : f32 to vector<8x384xf32>
    %79 = arith.select %77, %75, %78 : vector<8x384xi1>, vector<8x384xf32>
    %c4_i32_21 = arith.constant 4 : i32
    %80 = tpu.dynamic_rotate %79 by %c4_i32_21 dim 0 : vector<8x384xf32>, i32 -> vector<8x384xf32>
    %81 = arith.addf %79, %80 : vector<8x384xf32>
    %cst_22 = arith.constant dense<0.000000e+00> : vector<8xf32>
    %82 = vector.multi_reduction <add>, %81, %cst_22 [1] : vector<8x384xf32> to vector<8xf32>
    %83 = vector.shape_cast %82 : vector<8xf32> to vector<8x1xf32>
    %cst_23 = arith.constant 0.001953125 : f32
    %84 = vector.broadcast %cst_23 : f32 to vector<8x1xf32>
    %85 = arith.mulf %83, %84 : vector<8x1xf32>
    %86 = arith.mulf %79, %75 : vector<8x384xf32>
    %c4_i32_24 = arith.constant 4 : i32
    %87 = tpu.dynamic_rotate %86 by %c4_i32_24 dim 0 : vector<8x384xf32>, i32 -> vector<8x384xf32>
    %88 = arith.addf %86, %87 : vector<8x384xf32>
    %cst_25 = arith.constant dense<0.000000e+00> : vector<8xf32>
    %89 = vector.multi_reduction <add>, %88, %cst_25 [1] : vector<8x384xf32> to vector<8xf32>
    %90 = vector.shape_cast %89 : vector<8xf32> to vector<8x1xf32>
    %cst_26 = arith.constant 0.001953125 : f32
    %91 = vector.broadcast %cst_26 : f32 to vector<8x1xf32>
    %92 = arith.mulf %90, %91 : vector<8x1xf32>
    %93 = arith.mulf %85, %85 : vector<8x1xf32>
    %94 = arith.subf %92, %93 : vector<8x1xf32>
    %95 = vector.broadcast %85 : vector<8x1xf32> to vector<8x384xf32>
    %96 = arith.subf %75, %95 : vector<8x384xf32>
    %cst_27 = arith.constant 9.99999974E-6 : f32
    %97 = vector.broadcast %cst_27 : f32 to vector<8x1xf32>
    %98 = arith.addf %94, %97 : vector<8x1xf32>
    %99 = math.rsqrt %98 : vector<8x1xf32>
    %100 = vector.broadcast %99 : vector<8x1xf32> to vector<8x384xf32>
    %101 = arith.mulf %96, %100 : vector<8x384xf32>
    %c0_28 = arith.constant 0 : index
    %c0_29 = arith.constant 0 : index
    %102 = vector.load %arg3[%c0_28, %c0_29] : memref<8x2xf32, #tpu.memory_space<vmem>>, vector<8x1xf32>
    %103 = vector.broadcast %102 : vector<8x1xf32> to vector<8x384xf32>
    %104 = arith.mulf %101, %103 : vector<8x384xf32>
    %c0_30 = arith.constant 0 : index
    %c1 = arith.constant 1 : index
    %105 = vector.load %arg3[%c0_30, %c1] : memref<8x2xf32, #tpu.memory_space<vmem>>, vector<8x1xf32>
    %106 = vector.broadcast %105 : vector<8x1xf32> to vector<8x384xf32>
    %107 = arith.addf %104, %106 : vector<8x384xf32>
    %cst_31 = arith.constant 0.000000e+00 : f32
    %108 = vector.broadcast %cst_31 : f32 to vector<8x384xf32>
    %109 = arith.maximumf %107, %108 : vector<8x384xf32>
    %cst_32 = arith.constant 0.000000e+00 : f32
    %110 = vector.shape_cast %2 : vector<1x384xi1> to vector<1x384xi1>
    %111 = vector.broadcast %110 : vector<1x384xi1> to vector<8x384xi1>
    %112 = vector.broadcast %cst_32 : f32 to vector<8x384xf32>
    %113 = arith.select %111, %109, %112 : vector<8x384xi1>, vector<8x384xf32>
    %c382_i32_33 = arith.constant 382 : i32
    %114 = tpu.dynamic_rotate %109 by %c382_i32_33 dim 1 : vector<8x384xf32>, i32 -> vector<8x384xf32>
    %115 = vector.shape_cast %4 : vector<1x384xi1> to vector<1x384xi1>
    %116 = vector.broadcast %115 : vector<1x384xi1> to vector<8x384xi1>
    %117 = arith.select %116, %114, %113 : vector<8x384xi1>, vector<8x384xf32>
    %c2_i32_34 = arith.constant 2 : i32
    %118 = tpu.dynamic_rotate %109 by %c2_i32_34 dim 1 : vector<8x384xf32>, i32 -> vector<8x384xf32>
    %119 = vector.shape_cast %6 : vector<1x384xi1> to vector<1x384xi1>
    %120 = vector.broadcast %119 : vector<1x384xi1> to vector<8x384xi1>
    %121 = arith.select %120, %118, %117 : vector<8x384xi1>, vector<8x384xf32>
    %c348_i32_35 = arith.constant 348 : i32
    %122 = tpu.dynamic_rotate %109 by %c348_i32_35 dim 1 : vector<8x384xf32>, i32 -> vector<8x384xf32>
    %123 = vector.shape_cast %8 : vector<1x384xi1> to vector<1x384xi1>
    %124 = vector.broadcast %123 : vector<1x384xi1> to vector<8x384xi1>
    %125 = arith.select %124, %122, %121 : vector<8x384xi1>, vector<8x384xf32>
    %c346_i32_36 = arith.constant 346 : i32
    %126 = tpu.dynamic_rotate %109 by %c346_i32_36 dim 1 : vector<8x384xf32>, i32 -> vector<8x384xf32>
    %127 = vector.shape_cast %10 : vector<1x384xi1> to vector<1x384xi1>
    %128 = vector.broadcast %127 : vector<1x384xi1> to vector<8x384xi1>
    %129 = arith.select %128, %126, %125 : vector<8x384xi1>, vector<8x384xf32>
    %c350_i32_37 = arith.constant 350 : i32
    %130 = tpu.dynamic_rotate %109 by %c350_i32_37 dim 1 : vector<8x384xf32>, i32 -> vector<8x384xf32>
    %131 = vector.shape_cast %12 : vector<1x384xi1> to vector<1x384xi1>
    %132 = vector.broadcast %131 : vector<1x384xi1> to vector<8x384xi1>
    %133 = arith.select %132, %130, %129 : vector<8x384xi1>, vector<8x384xf32>
    %c36_i32_38 = arith.constant 36 : i32
    %134 = tpu.dynamic_rotate %109 by %c36_i32_38 dim 1 : vector<8x384xf32>, i32 -> vector<8x384xf32>
    %135 = vector.shape_cast %14 : vector<1x384xi1> to vector<1x384xi1>
    %136 = vector.broadcast %135 : vector<1x384xi1> to vector<8x384xi1>
    %137 = arith.select %136, %134, %133 : vector<8x384xi1>, vector<8x384xf32>
    %c34_i32_39 = arith.constant 34 : i32
    %138 = tpu.dynamic_rotate %109 by %c34_i32_39 dim 1 : vector<8x384xf32>, i32 -> vector<8x384xf32>
    %139 = vector.shape_cast %16 : vector<1x384xi1> to vector<1x384xi1>
    %140 = vector.broadcast %139 : vector<1x384xi1> to vector<8x384xi1>
    %141 = arith.select %140, %138, %137 : vector<8x384xi1>, vector<8x384xf32>
    %c38_i32_40 = arith.constant 38 : i32
    %142 = tpu.dynamic_rotate %109 by %c38_i32_40 dim 1 : vector<8x384xf32>, i32 -> vector<8x384xf32>
    %143 = vector.shape_cast %18 : vector<1x384xi1> to vector<1x384xi1>
    %144 = vector.broadcast %143 : vector<1x384xi1> to vector<8x384xi1>
    %145 = arith.select %144, %142, %141 : vector<8x384xi1>, vector<8x384xf32>
    %c19_i32_41 = arith.constant 19 : i32
    %146 = tpu.dynamic_rotate %145 by %c19_i32_41 dim 1 : vector<8x384xf32>, i32 -> vector<8x384xf32>
    %c0_42 = arith.constant 0 : index
    %c0_43 = arith.constant 0 : index
    %147 = vector.load %arg7[%c0_42, %c0_43] : memref<72x384xf32, #tpu.memory_space<vmem>>, vector<8x384xf32>
    tpu.vector_store %arg7[%c0_42, %c0_43], %146 {strides = array<i32>} : memref<72x384xf32, #tpu.memory_space<vmem>>, vector<8x384xf32>,
    %c18_i32_44 = arith.constant 18 : i32
    %148 = tpu.dynamic_rotate %145 by %c18_i32_44 dim 1 : vector<8x384xf32>, i32 -> vector<8x384xf32>
    %c8_45 = arith.constant 8 : index
    %c0_46 = arith.constant 0 : index
    %149 = vector.load %arg7[%c8_45, %c0_46] : memref<72x384xf32, #tpu.memory_space<vmem>>, vector<8x384xf32>
    tpu.vector_store %arg7[%c8_45, %c0_46], %148 {strides = array<i32>} : memref<72x384xf32, #tpu.memory_space<vmem>>, vector<8x384xf32>,
    %c17_i32_47 = arith.constant 17 : i32
    %150 = tpu.dynamic_rotate %145 by %c17_i32_47 dim 1 : vector<8x384xf32>, i32 -> vector<8x384xf32>
    %c16_48 = arith.constant 16 : index
    %c0_49 = arith.constant 0 : index
    %151 = vector.load %arg7[%c16_48, %c0_49] : memref<72x384xf32, #tpu.memory_space<vmem>>, vector<8x384xf32>
    tpu.vector_store %arg7[%c16_48, %c0_49], %150 {strides = array<i32>} : memref<72x384xf32, #tpu.memory_space<vmem>>, vector<8x384xf32>,
    %c1_i32_50 = arith.constant 1 : i32
    %152 = tpu.dynamic_rotate %145 by %c1_i32_50 dim 1 : vector<8x384xf32>, i32 -> vector<8x384xf32>
    %c24_51 = arith.constant 24 : index
    %c0_52 = arith.constant 0 : index
    %153 = vector.load %arg7[%c24_51, %c0_52] : memref<72x384xf32, #tpu.memory_space<vmem>>, vector<8x384xf32>
    tpu.vector_store %arg7[%c24_51, %c0_52], %152 {strides = array<i32>} : memref<72x384xf32, #tpu.memory_space<vmem>>, vector<8x384xf32>,
    %c32_53 = arith.constant 32 : index
    %c0_54 = arith.constant 0 : index
    %154 = vector.load %arg7[%c32_53, %c0_54] : memref<72x384xf32, #tpu.memory_space<vmem>>, vector<8x384xf32>
    tpu.vector_store %arg7[%c32_53, %c0_54], %145 {strides = array<i32>} : memref<72x384xf32, #tpu.memory_space<vmem>>, vector<8x384xf32>,
    %c383_i32_55 = arith.constant 383 : i32
    %155 = tpu.dynamic_rotate %145 by %c383_i32_55 dim 1 : vector<8x384xf32>, i32 -> vector<8x384xf32>
    %c40_56 = arith.constant 40 : index
    %c0_57 = arith.constant 0 : index
    %156 = vector.load %arg7[%c40_56, %c0_57] : memref<72x384xf32, #tpu.memory_space<vmem>>, vector<8x384xf32>
    tpu.vector_store %arg7[%c40_56, %c0_57], %155 {strides = array<i32>} : memref<72x384xf32, #tpu.memory_space<vmem>>, vector<8x384xf32>,
    %c367_i32_58 = arith.constant 367 : i32
    %157 = tpu.dynamic_rotate %145 by %c367_i32_58 dim 1 : vector<8x384xf32>, i32 -> vector<8x384xf32>
    %c48_59 = arith.constant 48 : index
    %c0_60 = arith.constant 0 : index
    %158 = vector.load %arg7[%c48_59, %c0_60] : memref<72x384xf32, #tpu.memory_space<vmem>>, vector<8x384xf32>
    tpu.vector_store %arg7[%c48_59, %c0_60], %157 {strides = array<i32>} : memref<72x384xf32, #tpu.memory_space<vmem>>, vector<8x384xf32>,
    %c366_i32_61 = arith.constant 366 : i32
    %159 = tpu.dynamic_rotate %145 by %c366_i32_61 dim 1 : vector<8x384xf32>, i32 -> vector<8x384xf32>
    %c56_62 = arith.constant 56 : index
    %c0_63 = arith.constant 0 : index
    %160 = vector.load %arg7[%c56_62, %c0_63] : memref<72x384xf32, #tpu.memory_space<vmem>>, vector<8x384xf32>
    tpu.vector_store %arg7[%c56_62, %c0_63], %159 {strides = array<i32>} : memref<72x384xf32, #tpu.memory_space<vmem>>, vector<8x384xf32>,
    %c365_i32_64 = arith.constant 365 : i32
    %161 = tpu.dynamic_rotate %145 by %c365_i32_64 dim 1 : vector<8x384xf32>, i32 -> vector<8x384xf32>
    %c64_65 = arith.constant 64 : index
    %c0_66 = arith.constant 0 : index
    %162 = vector.load %arg7[%c64_65, %c0_66] : memref<72x384xf32, #tpu.memory_space<vmem>>, vector<8x384xf32>
    tpu.vector_store %arg7[%c64_65, %c0_66], %161 {strides = array<i32>} : memref<72x384xf32, #tpu.memory_space<vmem>>, vector<8x384xf32>,
    %c0_67 = arith.constant 0 : index
    %c0_68 = arith.constant 0 : index
    %163 = vector.load %arg4[%c0_67, %c0_68] : memref<8x72xf32, #tpu.memory_space<vmem>>, vector<8x72xf32>
    %c0_69 = arith.constant 0 : index
    %c0_70 = arith.constant 0 : index
    %164 = vector.load %arg7[%c0_69, %c0_70] : memref<72x384xf32, #tpu.memory_space<vmem>>, vector<72x384xf32>
    %cst_71 = arith.constant dense<0.000000e+00> : vector<8x384xf32>
    %165 = tpu.matmul %163, %164, %cst_71 {dimension_numbers = #tpu.dot_dimension_numbers<[1], [0], [0], [1], [0, 0, 1, 1], [], []>} : vector<8x72xf32>, vector<72x384xf32>, vector<8x384xf32> -> vector<8x384xf32>
    %cst_72 = arith.constant 0.000000e+00 : f32
    %166 = vector.shape_cast %2 : vector<1x384xi1> to vector<1x384xi1>
    %167 = vector.broadcast %166 : vector<1x384xi1> to vector<8x384xi1>
    %168 = vector.broadcast %cst_72 : f32 to vector<8x384xf32>
    %169 = arith.select %167, %165, %168 : vector<8x384xi1>, vector<8x384xf32>
    %c4_i32_73 = arith.constant 4 : i32
    %170 = tpu.dynamic_rotate %169 by %c4_i32_73 dim 0 : vector<8x384xf32>, i32 -> vector<8x384xf32>
    %171 = arith.addf %169, %170 : vector<8x384xf32>
    %cst_74 = arith.constant dense<0.000000e+00> : vector<8xf32>
    %172 = vector.multi_reduction <add>, %171, %cst_74 [1] : vector<8x384xf32> to vector<8xf32>
    %173 = vector.shape_cast %172 : vector<8xf32> to vector<8x1xf32>
    %cst_75 = arith.constant 0.001953125 : f32
    %174 = vector.broadcast %cst_75 : f32 to vector<8x1xf32>
    %175 = arith.mulf %173, %174 : vector<8x1xf32>
    %176 = arith.mulf %169, %165 : vector<8x384xf32>
    %c4_i32_76 = arith.constant 4 : i32
    %177 = tpu.dynamic_rotate %176 by %c4_i32_76 dim 0 : vector<8x384xf32>, i32 -> vector<8x384xf32>
    %178 = arith.addf %176, %177 : vector<8x384xf32>
    %cst_77 = arith.constant dense<0.000000e+00> : vector<8xf32>
    %179 = vector.multi_reduction <add>, %178, %cst_77 [1] : vector<8x384xf32> to vector<8xf32>
    %180 = vector.shape_cast %179 : vector<8xf32> to vector<8x1xf32>
    %cst_78 = arith.constant 0.001953125 : f32
    %181 = vector.broadcast %cst_78 : f32 to vector<8x1xf32>
    %182 = arith.mulf %180, %181 : vector<8x1xf32>
    %183 = arith.mulf %175, %175 : vector<8x1xf32>
    %184 = arith.subf %182, %183 : vector<8x1xf32>
    %185 = vector.broadcast %175 : vector<8x1xf32> to vector<8x384xf32>
    %186 = arith.subf %165, %185 : vector<8x384xf32>
    %cst_79 = arith.constant 9.99999974E-6 : f32
    %187 = vector.broadcast %cst_79 : f32 to vector<8x1xf32>
    %188 = arith.addf %184, %187 : vector<8x1xf32>
    %189 = math.rsqrt %188 : vector<8x1xf32>
    %190 = vector.broadcast %189 : vector<8x1xf32> to vector<8x384xf32>
    %191 = arith.mulf %186, %190 : vector<8x384xf32>
    %c0_80 = arith.constant 0 : index
    %c0_81 = arith.constant 0 : index
    %192 = vector.load %arg5[%c0_80, %c0_81] : memref<8x2xf32, #tpu.memory_space<vmem>>, vector<8x1xf32>
    %193 = vector.broadcast %192 : vector<8x1xf32> to vector<8x384xf32>
    %194 = arith.mulf %191, %193 : vector<8x384xf32>
    %c0_82 = arith.constant 0 : index
    %c1_83 = arith.constant 1 : index
    %195 = vector.load %arg5[%c0_82, %c1_83] : memref<8x2xf32, #tpu.memory_space<vmem>>, vector<8x1xf32>
    %196 = vector.broadcast %195 : vector<8x1xf32> to vector<8x384xf32>
    %197 = arith.addf %194, %196 : vector<8x384xf32>
    %198 = arith.addf %19, %197 : vector<8x384xf32>
    %c0_84 = arith.constant 0 : index
    %c0_85 = arith.constant 0 : index
    %199 = vector.load %arg6[%c0_84, %c0_85] : memref<8x384xf32, #tpu.memory_space<vmem>>, vector<8x384xf32>
    tpu.vector_store %arg6[%c0_84, %c0_85], %198 {strides = array<i32>} : memref<8x384xf32, #tpu.memory_space<vmem>>, vector<8x384xf32>,
    return
  }
}

</mosaic_0001>

<llo_original>
// kernel: res_block.1
$region0: #{res_block.1}
  #allocation0 [shape = 'u32[]', space=smem, size = 0x4, offset = 0x4, fixed_abs, tag = 'smem constant byte address 0x4 - core index']
  #allocation1 [shape = 'u32[144,128]{1,0:T(1,128)}', space=vmem, size = 0x12000, scoped, tag = 'internal scratch']
  #allocation2 [shape = 'f32[72,384]{1,0:T(8,128)}', space=vmem, size = 0x1b000, scoped, tag = 'scratch operand']
  %s0 = inlined_call_operand.vmem [shape: s32[1,384], index: 0, kind: input, shape index: {}]
  %s1 = inlined_call_operand.vmem [shape: f32[8,384], index: 1, kind: input, shape index: {}]
  %s2 = inlined_call_operand.vmem [shape: f32[8,72], index: 2, kind: input, shape index: {}]
  %s3 = inlined_call_operand.vmem [shape: f32[8,2], index: 3, kind: input, shape index: {}]
  %s4 = inlined_call_operand.vmem [shape: f32[8,72], index: 4, kind: input, shape index: {}]
  %s5 = inlined_call_operand.vmem [shape: f32[8,2], index: 5, kind: input, shape index: {}]
  %s6 = inlined_call_operand.vmem [shape: f32[8,384], index: 6, kind: output, shape index: {}]
  %s7 = sld [smem:[#allocation0]]
  $region34: #{res_block.1} parent=0
    _
  %s9 = ssub.s32 1, %s7
  %s10 = scalar_select 0, %s9, %s7
  // Predicated region
  $region2: #{res_block.1} parent=0 // pred_check
    _
  $region3: #{res_block.1} parent=0 // pred_check_branch
    %12 = sbr.rel (0) target = $region5
  $region4: #{res_block.1} parent=0 // pred_region
    _
  $region5: #{res_block.1} parent=0 // pred_fallthru
    _
  // Predicated region
  $region6: #{res_block.1} parent=0 // pred_check
    _
  $region7: #{res_block.1} parent=0 // pred_check_branch
    %14 = sbr.rel (0) target = $region9
  $region8: #{res_block.1} parent=0 // pred_region
    _
  $region9: #{res_block.1} parent=0 // pred_fallthru
    _
  // Predicated region
  $region10: #{res_block.1} parent=0 // pred_check
    _
  $region11: #{res_block.1} parent=0 // pred_check_branch
    %16 = sbr.rel (0) target = $region13
  $region12: #{res_block.1} parent=0 // pred_region
    _
  $region13: #{res_block.1} parent=0 // pred_fallthru
    _
  // Predicated region
  $region14: #{res_block.1} parent=0 // pred_check
    _
  $region15: #{res_block.1} parent=0 // pred_check_branch
    %18 = sbr.rel (0) target = $region17
  $region16: #{res_block.1} parent=0 // pred_region
    _
  $region17: #{res_block.1} parent=0 // pred_fallthru
    _
  // Predicated region
  $region18: #{res_block.1} parent=0 // pred_check
    _
  $region19: #{res_block.1} parent=0 // pred_check_branch
    %20 = sbr.rel (0) target = $region21
  $region20: #{res_block.1} parent=0 // pred_region
    _
  $region21: #{res_block.1} parent=0 // pred_fallthru
    _
  // Predicated region
  $region22: #{res_block.1} parent=0 // pred_check
    _
  $region23: #{res_block.1} parent=0 // pred_check_branch
    %22 = sbr.rel (0) target = $region25
  $region24: #{res_block.1} parent=0 // pred_region
    _
  $region25: #{res_block.1} parent=0 // pred_fallthru
    _
  %v23 = vld [vmem:[%s0] sm:$0x7]
  %vm24 = vcmp.eq.s32.totalorder %v23, 0
  %vm25 = vcmp.eq.s32.totalorder %v23, 1
  %vm26 = vcmp.eq.s32.totalorder %v23, 2
  %vm27 = vcmp.eq.s32.totalorder %v23, 3
  %vm28 = vcmp.eq.s32.totalorder %v23, 4
  %vm29 = vcmp.eq.s32.totalorder %v23, 5
  %vm30 = vcmp.eq.s32.totalorder %v23, 6
  %vm31 = vcmp.eq.s32.totalorder %v23, 7
  %vm32 = vcmp.eq.s32.totalorder %v23, 8
  %v33 = vld [vmem:[%s1] sm:$0xff]
  %v34 = vld [vmem:[%s1 + $0x8] sm:$0xff]
  %v35 = vld [vmem:[%s1 + $0x10] sm:$0xff]
  %v36 = vsel %vm24, 1, 0
  %v37 = vlaneseq
  %v38 = vshrl.u32 %v37, 7
  %v39 = vsub.s32 0, %v38
  %v40 = vrot.slane %v36, %v39
  %v41 = vlaneseq
  %v42 = vshrl.u32 %v41, 7
  %v43 = vsub.s32 1, %v42
  %v44 = vrot.slane %v36, %v43
  %v45 = vlaneseq
  %v46 = vshrl.u32 %v45, 7
  %v47 = vsub.s32 2, %v46
  %v48 = vrot.slane %v36, %v47
  %vm49 = vcmp.eq.s32.totalorder %v40, 1
  %vm50 = vcmp.eq.s32.totalorder %v44, 1
  %vm51 = vcmp.eq.s32.totalorder %v48, 1
  %v52 = vsel %vm49, %v33, 0.0
  %v53 = vsel %vm50, %v34, 0.0
  %v54 = vsel %vm51, %v35, 0.0
  %55 = vrot.lane.b32.xlu0 %v33, 126
  %v56 = vpop.permute.xlu0 %55
  %57 = vrot.lane.b32.xlu0 %v34, 126
  %v58 = vpop.permute.xlu0 %57
  %59 = vrot.lane.b32.xlu0 %v35, 126
  %v60 = vpop.permute.xlu0 %59
  %v61 = vlaneseq
  %v62 = vand.u32 %v61, 127
  %vm63 = vcmp.lt.s32.totalorder %v62, 126
  %v64 = vsel %vm63, %v58, %v60
  %v65 = vsel %vm63, %v56, %v58
  %v66 = vsel %vm63, %v60, %v56
  %v67 = vsel %vm25, 1, 0
  %v68 = vlaneseq
  %v69 = vshrl.u32 %v68, 7
  %v70 = vsub.s32 0, %v69
  %v71 = vrot.slane %v67, %v70
  %v72 = vlaneseq
  %v73 = vshrl.u32 %v72, 7
  %v74 = vsub.s32 1, %v73
  %v75 = vrot.slane %v67, %v74
  %v76 = vlaneseq
  %v77 = vshrl.u32 %v76, 7
  %v78 = vsub.s32 2, %v77
  %v79 = vrot.slane %v67, %v78
  %vm80 = vcmp.eq.s32.totalorder %v71, 1
  %vm81 = vcmp.eq.s32.totalorder %v75, 1
  %vm82 = vcmp.eq.s32.totalorder %v79, 1
  %v83 = vsel %vm80, %v65, %v52
  %v84 = vsel %vm81, %v64, %v53
  %v85 = vsel %vm82, %v66, %v54
  %86 = vrot.lane.b32.xlu0 %v33, 2
  %v87 = vpop.permute.xlu0 %86
  %88 = vrot.lane.b32.xlu0 %v34, 2
  %v89 = vpop.permute.xlu0 %88
  %90 = vrot.lane.b32.xlu0 %v35, 2
  %v91 = vpop.permute.xlu0 %90
  %vm92 = vcmp.lt.s32.totalorder %v62, 2
  %v93 = vsel %vm92, %v89, %v91
  %v94 = vsel %vm92, %v87, %v89
  %v95 = vsel %vm92, %v91, %v87
  %v96 = vsel %vm26, 1, 0
  %v97 = vlaneseq
  %v98 = vshrl.u32 %v97, 7
  %v99 = vsub.s32 0, %v98
  %v100 = vrot.slane %v96, %v99
  %v101 = vlaneseq
  %v102 = vshrl.u32 %v101, 7
  %v103 = vsub.s32 1, %v102
  %v104 = vrot.slane %v96, %v103
  %v105 = vlaneseq
  %v106 = vshrl.u32 %v105, 7
  %v107 = vsub.s32 2, %v106
  %v108 = vrot.slane %v96, %v107
  %vm109 = vcmp.eq.s32.totalorder %v100, 1
  %vm110 = vcmp.eq.s32.totalorder %v104, 1
  %vm111 = vcmp.eq.s32.totalorder %v108, 1
  %v112 = vsel %vm109, %v95, %v83
  %v113 = vsel %vm110, %v94, %v84
  %v114 = vsel %vm111, %v93, %v85
  %115 = vrot.lane.b32.xlu0 %v33, 92
  %v116 = vpop.permute.xlu0 %115
  %117 = vrot.lane.b32.xlu0 %v34, 92
  %v118 = vpop.permute.xlu0 %117
  %119 = vrot.lane.b32.xlu0 %v35, 92
  %v120 = vpop.permute.xlu0 %119
  %vm121 = vcmp.lt.s32.totalorder %v62, 92
  %v122 = vsel %vm121, %v118, %v120
  %v123 = vsel %vm121, %v116, %v118
  %v124 = vsel %vm121, %v120, %v116
  %v125 = vsel %vm27, 1, 0
  %v126 = vlaneseq
  %v127 = vshrl.u32 %v126, 7
  %v128 = vsub.s32 0, %v127
  %v129 = vrot.slane %v125, %v128
  %v130 = vlaneseq
  %v131 = vshrl.u32 %v130, 7
  %v132 = vsub.s32 1, %v131
  %v133 = vrot.slane %v125, %v132
  %v134 = vlaneseq
  %v135 = vshrl.u32 %v134, 7
  %v136 = vsub.s32 2, %v135
  %v137 = vrot.slane %v125, %v136
  %vm138 = vcmp.eq.s32.totalorder %v129, 1
  %vm139 = vcmp.eq.s32.totalorder %v133, 1
  %vm140 = vcmp.eq.s32.totalorder %v137, 1
  %v141 = vsel %vm138, %v123, %v112
  %v142 = vsel %vm139, %v122, %v113
  %v143 = vsel %vm140, %v124, %v114
  %144 = vrot.lane.b32.xlu0 %v33, 90
  %v145 = vpop.permute.xlu0 %144
  %146 = vrot.lane.b32.xlu0 %v34, 90
  %v147 = vpop.permute.xlu0 %146
  %148 = vrot.lane.b32.xlu0 %v35, 90
  %v149 = vpop.permute.xlu0 %148
  %vm150 = vcmp.lt.s32.totalorder %v62, 90
  %v151 = vsel %vm150, %v147, %v149
  %v152 = vsel %vm150, %v145, %v147
  %v153 = vsel %vm150, %v149, %v145
  %v154 = vsel %vm28, 1, 0
  %v155 = vlaneseq
  %v156 = vshrl.u32 %v155, 7
  %v157 = vsub.s32 0, %v156
  %v158 = vrot.slane %v154, %v157
  %v159 = vlaneseq
  %v160 = vshrl.u32 %v159, 7
  %v161 = vsub.s32 1, %v160
  %v162 = vrot.slane %v154, %v161
  %v163 = vlaneseq
  %v164 = vshrl.u32 %v163, 7
  %v165 = vsub.s32 2, %v164
  %v166 = vrot.slane %v154, %v165
  %vm167 = vcmp.eq.s32.totalorder %v158, 1
  %vm168 = vcmp.eq.s32.totalorder %v162, 1
  %vm169 = vcmp.eq.s32.totalorder %v166, 1
  %v170 = vsel %vm167, %v152, %v141
  %v171 = vsel %vm168, %v151, %v142
  %v172 = vsel %vm169, %v153, %v143
  %173 = vrot.lane.b32.xlu0 %v33, 94
  %v174 = vpop.permute.xlu0 %173
  %175 = vrot.lane.b32.xlu0 %v34, 94
  %v176 = vpop.permute.xlu0 %175
  %177 = vrot.lane.b32.xlu0 %v35, 94
  %v178 = vpop.permute.xlu0 %177
  %vm179 = vcmp.lt.s32.totalorder %v62, 94
  %v180 = vsel %vm179, %v176, %v178
  %v181 = vsel %vm179, %v174, %v176
  %v182 = vsel %vm179, %v178, %v174
  %v183 = vsel %vm29, 1, 0
  %v184 = vlaneseq
  %v185 = vshrl.u32 %v184, 7
  %v186 = vsub.s32 0, %v185
  %v187 = vrot.slane %v183, %v186
  %v188 = vlaneseq
  %v189 = vshrl.u32 %v188, 7
  %v190 = vsub.s32 1, %v189
  %v191 = vrot.slane %v183, %v190
  %v192 = vlaneseq
  %v193 = vshrl.u32 %v192, 7
  %v194 = vsub.s32 2, %v193
  %v195 = vrot.slane %v183, %v194
  %vm196 = vcmp.eq.s32.totalorder %v187, 1
  %vm197 = vcmp.eq.s32.totalorder %v191, 1
  %vm198 = vcmp.eq.s32.totalorder %v195, 1
  %v199 = vsel %vm196, %v181, %v170
  %v200 = vsel %vm197, %v180, %v171
  %v201 = vsel %vm198, %v182, %v172
  %202 = vrot.lane.b32.xlu0 %v33, 36
  %v203 = vpop.permute.xlu0 %202
  %204 = vrot.lane.b32.xlu0 %v34, 36
  %v205 = vpop.permute.xlu0 %204
  %206 = vrot.lane.b32.xlu0 %v35, 36
  %v207 = vpop.permute.xlu0 %206
  %vm208 = vcmp.lt.s32.totalorder %v62, 36
  %v209 = vsel %vm208, %v205, %v207
  %v210 = vsel %vm208, %v203, %v205
  %v211 = vsel %vm208, %v207, %v203
  %v212 = vsel %vm30, 1, 0
  %v213 = vlaneseq
  %v214 = vshrl.u32 %v213, 7
  %v215 = vsub.s32 0, %v214
  %v216 = vrot.slane %v212, %v215
  %v217 = vlaneseq
  %v218 = vshrl.u32 %v217, 7
  %v219 = vsub.s32 1, %v218
  %v220 = vrot.slane %v212, %v219
  %v221 = vlaneseq
  %v222 = vshrl.u32 %v221, 7
  %v223 = vsub.s32 2, %v222
  %v224 = vrot.slane %v212, %v223
  %vm225 = vcmp.eq.s32.totalorder %v216, 1
  %vm226 = vcmp.eq.s32.totalorder %v220, 1
  %vm227 = vcmp.eq.s32.totalorder %v224, 1
  %v228 = vsel %vm225, %v211, %v199
  %v229 = vsel %vm226, %v210, %v200
  %v230 = vsel %vm227, %v209, %v201
  %231 = vrot.lane.b32.xlu0 %v33, 34
  %v232 = vpop.permute.xlu0 %231
  %233 = vrot.lane.b32.xlu0 %v34, 34
  %v234 = vpop.permute.xlu0 %233
  %235 = vrot.lane.b32.xlu0 %v35, 34
  %v236 = vpop.permute.xlu0 %235
  %vm237 = vcmp.lt.s32.totalorder %v62, 34
  %v238 = vsel %vm237, %v234, %v236
  %v239 = vsel %vm237, %v232, %v234
  %v240 = vsel %vm237, %v236, %v232
  %v241 = vsel %vm31, 1, 0
  %v242 = vlaneseq
  %v243 = vshrl.u32 %v242, 7
  %v244 = vsub.s32 0, %v243
  %v245 = vrot.slane %v241, %v244
  %v246 = vlaneseq
  %v247 = vshrl.u32 %v246, 7
  %v248 = vsub.s32 1, %v247
  %v249 = vrot.slane %v241, %v248
  %v250 = vlaneseq
  %v251 = vshrl.u32 %v250, 7
  %v252 = vsub.s32 2, %v251
  %v253 = vrot.slane %v241, %v252
  %vm254 = vcmp.eq.s32.totalorder %v245, 1
  %vm255 = vcmp.eq.s32.totalorder %v249, 1
  %vm256 = vcmp.eq.s32.totalorder %v253, 1
  %v257 = vsel %vm254, %v240, %v228
  %v258 = vsel %vm255, %v239, %v229
  %v259 = vsel %vm256, %v238, %v230
  %260 = vrot.lane.b32.xlu0 %v33, 38
  %v261 = vpop.permute.xlu0 %260
  %262 = vrot.lane.b32.xlu0 %v34, 38
  %v263 = vpop.permute.xlu0 %262
  %264 = vrot.lane.b32.xlu0 %v35, 38
  %v265 = vpop.permute.xlu0 %264
  %vm266 = vcmp.lt.s32.totalorder %v62, 38
  %v267 = vsel %vm266, %v263, %v265
  %v268 = vsel %vm266, %v261, %v263
  %v269 = vsel %vm266, %v265, %v261
  %v270 = vsel %vm32, 1, 0
  %v271 = vlaneseq
  %v272 = vshrl.u32 %v271, 7
  %v273 = vsub.s32 0, %v272
  %v274 = vrot.slane %v270, %v273
  %v275 = vlaneseq
  %v276 = vshrl.u32 %v275, 7
  %v277 = vsub.s32 1, %v276
  %v278 = vrot.slane %v270, %v277
  %v279 = vlaneseq
  %v280 = vshrl.u32 %v279, 7
  %v281 = vsub.s32 2, %v280
  %v282 = vrot.slane %v270, %v281
  %vm283 = vcmp.eq.s32.totalorder %v274, 1
  %vm284 = vcmp.eq.s32.totalorder %v278, 1
  %vm285 = vcmp.eq.s32.totalorder %v282, 1
  %v286 = vsel %vm283, %v269, %v257
  %v287 = vsel %vm284, %v268, %v258
  %v288 = vsel %vm285, %v267, %v259
  %289 = vrot.lane.b32.xlu0 %v286, 19
  %v290 = vpop.permute.xlu0 %289
  %291 = vrot.lane.b32.xlu0 %v287, 19
  %v292 = vpop.permute.xlu0 %291
  %293 = vrot.lane.b32.xlu0 %v288, 19
  %v294 = vpop.permute.xlu0 %293
  %vm295 = vcmp.lt.s32.totalorder %v62, 19
  %v296 = vsel %vm295, %v292, %v294
  %v297 = vsel %vm295, %v290, %v292
  %v298 = vsel %vm295, %v294, %v290
  %299 = vst [vmem:[#allocation2] sm:$0xff] %v298
  %300 = vst [vmem:[#allocation2 + $0x8] sm:$0xff] %v297
  %301 = vst [vmem:[#allocation2 + $0x10] sm:$0xff] %v296
  %302 = vrot.lane.b32.xlu0 %v286, 18
  %v303 = vpop.permute.xlu0 %302
  %304 = vrot.lane.b32.xlu0 %v287, 18
  %v305 = vpop.permute.xlu0 %304
  %306 = vrot.lane.b32.xlu0 %v288, 18
  %v307 = vpop.permute.xlu0 %306
  %vm308 = vcmp.lt.s32.totalorder %v62, 18
  %v309 = vsel %vm308, %v305, %v307
  %v310 = vsel %vm308, %v303, %v305
  %v311 = vsel %vm308, %v307, %v303
  %312 = vst [vmem:[#allocation2 + $0x18] sm:$0xff] %v311
  %313 = vst [vmem:[#allocation2 + $0x20] sm:$0xff] %v310
  %314 = vst [vmem:[#allocation2 + $0x28] sm:$0xff] %v309
  %315 = vrot.lane.b32.xlu0 %v286, 17
  %v316 = vpop.permute.xlu0 %315
  %317 = vrot.lane.b32.xlu0 %v287, 17
  %v318 = vpop.permute.xlu0 %317
  %319 = vrot.lane.b32.xlu0 %v288, 17
  %v320 = vpop.permute.xlu0 %319
  %vm321 = vcmp.lt.s32.totalorder %v62, 17
  %v322 = vsel %vm321, %v318, %v320
  %v323 = vsel %vm321, %v316, %v318
  %v324 = vsel %vm321, %v320, %v316
  %325 = vst [vmem:[#allocation2 + $0x30] sm:$0xff] %v324
  %326 = vst [vmem:[#allocation2 + $0x38] sm:$0xff] %v323
  %327 = vst [vmem:[#allocation2 + $0x40] sm:$0xff] %v322
  %328 = vrot.lane.b32.xlu0 %v286, 1
  %v329 = vpop.permute.xlu0 %328
  %330 = vrot.lane.b32.xlu0 %v287, 1
  %v331 = vpop.permute.xlu0 %330
  %332 = vrot.lane.b32.xlu0 %v288, 1
  %v333 = vpop.permute.xlu0 %332
  %vm334 = vcmp.lt.s32.totalorder %v62, 1
  %v335 = vsel %vm334, %v331, %v333
  %v336 = vsel %vm334, %v329, %v331
  %v337 = vsel %vm334, %v333, %v329
  %338 = vst [vmem:[#allocation2 + $0x48] sm:$0xff] %v337
  %339 = vst [vmem:[#allocation2 + $0x50] sm:$0xff] %v336
  %340 = vst [vmem:[#allocation2 + $0x58] sm:$0xff] %v335
  %341 = vst [vmem:[#allocation2 + $0x60] sm:$0xff] %v286
  %342 = vst [vmem:[#allocation2 + $0x68] sm:$0xff] %v287
  %343 = vst [vmem:[#allocation2 + $0x70] sm:$0xff] %v288
  %344 = vrot.lane.b32.xlu0 %v286, 127
  %v345 = vpop.permute.xlu0 %344
  %346 = vrot.lane.b32.xlu0 %v287, 127
  %v347 = vpop.permute.xlu0 %346
  %348 = vrot.lane.b32.xlu0 %v288, 127
  %v349 = vpop.permute.xlu0 %348
  %vm350 = vcmp.lt.s32.totalorder %v62, 127
  %v351 = vsel %vm350, %v347, %v349
  %v352 = vsel %vm350, %v345, %v347
  %v353 = vsel %vm350, %v349, %v345
  %354 = vst [vmem:[#allocation2 + $0x78] sm:$0xff] %v352
  %355 = vst [vmem:[#allocation2 + $0x80] sm:$0xff] %v351
  %356 = vst [vmem:[#allocation2 + $0x88] sm:$0xff] %v353
  %357 = vrot.lane.b32.xlu0 %v286, 111
  %v358 = vpop.permute.xlu0 %357
  %359 = vrot.lane.b32.xlu0 %v287, 111
  %v360 = vpop.permute.xlu0 %359
  %361 = vrot.lane.b32.xlu0 %v288, 111
  %v362 = vpop.permute.xlu0 %361
  %vm363 = vcmp.lt.s32.totalorder %v62, 111
  %v364 = vsel %vm363, %v360, %v362
  %v365 = vsel %vm363, %v358, %v360
  %v366 = vsel %vm363, %v362, %v358
  %367 = vst [vmem:[#allocation2 + $0x90] sm:$0xff] %v365
  %368 = vst [vmem:[#allocation2 + $0x98] sm:$0xff] %v364
  %369 = vst [vmem:[#allocation2 + $0xa0] sm:$0xff] %v366
  %370 = vrot.lane.b32.xlu0 %v286, 110
  %v371 = vpop.permute.xlu0 %370
  %372 = vrot.lane.b32.xlu0 %v287, 110
  %v373 = vpop.permute.xlu0 %372
  %374 = vrot.lane.b32.xlu0 %v288, 110
  %v375 = vpop.permute.xlu0 %374
  %vm376 = vcmp.lt.s32.totalorder %v62, 110
  %v377 = vsel %vm376, %v373, %v375
  %v378 = vsel %vm376, %v371, %v373
  %v379 = vsel %vm376, %v375, %v371
  %380 = vst [vmem:[#allocation2 + $0xa8] sm:$0xff] %v378
  %381 = vst [vmem:[#allocation2 + $0xb0] sm:$0xff] %v377
  %382 = vst [vmem:[#allocation2 + $0xb8] sm:$0xff] %v379
  %383 = vrot.lane.b32.xlu0 %v286, 109
  %v384 = vpop.permute.xlu0 %383
  %385 = vrot.lane.b32.xlu0 %v287, 109
  %v386 = vpop.permute.xlu0 %385
  %387 = vrot.lane.b32.xlu0 %v288, 109
  %v388 = vpop.permute.xlu0 %387
  %vm389 = vcmp.lt.s32.totalorder %v62, 109
  %v390 = vsel %vm389, %v386, %v388
  %v391 = vsel %vm389, %v384, %v386
  %v392 = vsel %vm389, %v388, %v384
  %393 = vst [vmem:[#allocation2 + $0xc0] sm:$0xff] %v391
  %394 = vst [vmem:[#allocation2 + $0xc8] sm:$0xff] %v390
  %395 = vst [vmem:[#allocation2 + $0xd0] sm:$0xff] %v392
  %v396 = vld [vmem:[%s2] sm:$0xff]
  %v397 = vld [vmem:[#allocation2] sm:$0xff]
  %v398 = vld [vmem:[#allocation2 + $0x8] sm:$0xff]
  %v399 = vld [vmem:[#allocation2 + $0x10] sm:$0xff]
  %v400 = vld [vmem:[#allocation2 + $0x18] sm:$0xff]
  %v401 = vld [vmem:[#allocation2 + $0x20] sm:$0xff]
  %v402 = vld [vmem:[#allocation2 + $0x28] sm:$0xff]
  %v403 = vld [vmem:[#allocation2 + $0x30] sm:$0xff]
  %v404 = vld [vmem:[#allocation2 + $0x38] sm:$0xff]
  %v405 = vld [vmem:[#allocation2 + $0x40] sm:$0xff]
  %v406 = vld [vmem:[#allocation2 + $0x48] sm:$0xff]
  %v407 = vld [vmem:[#allocation2 + $0x50] sm:$0xff]
  %v408 = vld [vmem:[#allocation2 + $0x58] sm:$0xff]
  %v409 = vld [vmem:[#allocation2 + $0x60] sm:$0xff]
  %v410 = vld [vmem:[#allocation2 + $0x68] sm:$0xff]
  %v411 = vld [vmem:[#allocation2 + $0x70] sm:$0xff]
  %v412 = vld [vmem:[#allocation2 + $0x78] sm:$0xff]
  %v413 = vld [vmem:[#allocation2 + $0x80] sm:$0xff]
  %v414 = vld [vmem:[#allocation2 + $0x88] sm:$0xff]
  %v415 = vld [vmem:[#allocation2 + $0x90] sm:$0xff]
  %v416 = vld [vmem:[#allocation2 + $0x98] sm:$0xff]
  %v417 = vld [vmem:[#allocation2 + $0xa0] sm:$0xff]
  %v418 = vld [vmem:[#allocation2 + $0xa8] sm:$0xff]
  %v419 = vld [vmem:[#allocation2 + $0xb0] sm:$0xff]
  %v420 = vld [vmem:[#allocation2 + $0xb8] sm:$0xff]
  %v421 = vld [vmem:[#allocation2 + $0xc0] sm:$0xff]
  %v422 = vld [vmem:[#allocation2 + $0xc8] sm:$0xff]
  %v423 = vld [vmem:[#allocation2 + $0xd0] sm:$0xff]
  %vm424 = vcmask 588800
  %v426 = vsel %vm424, %v396, 0
  %428 = vmatprep.subr.mxu0 0.0
  %429 = vmatpush1.msra.mxu0 0.0
  %430 = vmatprep.subr.mxu0 0.0
  %431 = vmatpush1.msra.mxu0 0.0
  %432 = vmatprep.subr.mxu0 0.0
  %433 = vmatpush1.msra.mxu0 0.0
  %434 = vmatprep.subr.mxu0 0.0
  %435 = vmatpush1.msra.mxu0 0.0
  %436 = vmatprep.subr.mxu0 0.0
  %437 = vmatpush1.msra.mxu0 0.0
  %438 = vmatprep.subr.mxu0 0.0
  %439 = vmatpush1.msra.mxu0 0.0
  %440 = vmatprep.subr.mxu0 0.0
  %441 = vmatpush1.msra.mxu0 0.0
  %442 = vmatprep.subr.mxu0 %v422
  %443 = vmatpush1.msra.mxu0 %v421
  %444 = vmatprep.subr.mxu0 %v419
  %445 = vmatpush1.msra.mxu0 %v418
  %446 = vmatprep.subr.mxu0 %v416
  %447 = vmatpush1.msra.mxu0 %v415
  %448 = vmatprep.subr.mxu0 %v413
  %449 = vmatpush1.msra.mxu0 %v412
  %450 = vmatprep.subr.mxu0 %v410
  %451 = vmatpush1.msra.mxu0 %v409
  %452 = vmatprep.subr.mxu0 %v407
  %453 = vmatpush1.msra.mxu0 %v406
  %454 = vmatprep.subr.mxu0 %v404
  %455 = vmatpush1.msra.mxu0 %v403
  %456 = vmatprep.subr.mxu0 %v401
  %457 = vmatpush1.msra.mxu0 %v400
  %458 = vmatprep.subr.mxu0 %v398
  %459 = vmatpush1.msra.mxu0 %v397
  %460 = vmatprep.subr.mxu0 0.0
  %461 = vmatpush2.msra.mxu0 0.0
  %462 = vmatprep.subr.mxu0 0.0
  %463 = vmatpush2.msra.mxu0 0.0
  %464 = vmatprep.subr.mxu0 0.0
  %465 = vmatpush2.msra.mxu0 0.0
  %466 = vmatprep.subr.mxu0 0.0
  %467 = vmatpush2.msra.mxu0 0.0
  %468 = vmatprep.subr.mxu0 0.0
  %469 = vmatpush2.msra.mxu0 0.0
  %470 = vmatprep.subr.mxu0 0.0
  %471 = vmatpush2.msra.mxu0 0.0
  %472 = vmatprep.subr.mxu0 0.0
  %473 = vmatpush2.msra.mxu0 0.0
  %474 = vmatprep.subr.mxu0 0.0
  %475 = vmatpush2.msra.mxu0 0.0
  %476 = vmatprep.subr.mxu0 0.0
  %477 = vmatpush2.msra.mxu0 0.0
  %478 = vmatprep.subr.mxu0 0.0
  %479 = vmatpush2.msra.mxu0 0.0
  %480 = vmatprep.subr.mxu0 0.0
  %481 = vmatpush2.msra.mxu0 0.0
  %482 = vmatprep.subr.mxu0 0.0
  %483 = vmatpush2.msra.mxu0 0.0
  %484 = vmatprep.subr.mxu0 0.0
  %485 = vmatpush2.msra.mxu0 0.0
  %486 = vmatprep.subr.mxu0 0.0
  %487 = vmatpush2.msra.mxu0 0.0
  %488 = vmatprep.subr.mxu0 0.0
  %489 = vmatpush2.msra.mxu0 0.0
  %490 = vmatprep.subr.mxu0 0.0
  %491 = vmatpush2.msra.mxu0 0.0
  %492 = vmatprep.mubr.f32.mxu0 0.0
  %493 = vmatmul.mubr.f32.gmra.mxu0 %v426
  %v494 = vpop.f32.mrf.mxu0
  %v495 = vadd.f32 0.0, %v494
  %v496 = vpop.f32.mrf.mxu0
  %v497 = vadd.f32 0.0, %v496
  %498 = vdwg.mxu0
  %499 = vmatprep.subr.mxu0 0.0
  %500 = vmatpush1.msra.mxu0 0.0
  %501 = vmatprep.subr.mxu0 0.0
  %502 = vmatpush1.msra.mxu0 0.0
  %503 = vmatprep.subr.mxu0 0.0
  %504 = vmatpush1.msra.mxu0 0.0
  %505 = vmatprep.subr.mxu0 0.0
  %506 = vmatpush1.msra.mxu0 0.0
  %507 = vmatprep.subr.mxu0 0.0
  %508 = vmatpush1.msra.mxu0 0.0
  %509 = vmatprep.subr.mxu0 0.0
  %510 = vmatpush1.msra.mxu0 0.0
  %511 = vmatprep.subr.mxu0 0.0
  %512 = vmatpush1.msra.mxu0 0.0
  %513 = vmatprep.subr.mxu0 0.0
  %514 = vmatpush1.msra.mxu0 %v423
  %515 = vmatprep.subr.mxu0 0.0
  %516 = vmatpush1.msra.mxu0 %v420
  %517 = vmatprep.subr.mxu0 0.0
  %518 = vmatpush1.msra.mxu0 %v417
  %519 = vmatprep.subr.mxu0 0.0
  %520 = vmatpush1.msra.mxu0 %v414
  %521 = vmatprep.subr.mxu0 0.0
  %522 = vmatpush1.msra.mxu0 %v411
  %523 = vmatprep.subr.mxu0 0.0
  %524 = vmatpush1.msra.mxu0 %v408
  %525 = vmatprep.subr.mxu0 0.0
  %526 = vmatpush1.msra.mxu0 %v405
  %527 = vmatprep.subr.mxu0 0.0
  %528 = vmatpush1.msra.mxu0 %v402
  %529 = vmatprep.subr.mxu0 0.0
  %530 = vmatpush1.msra.mxu0 %v399
  %531 = vmatprep.subr.mxu0 0.0
  %532 = vmatpush2.msra.mxu0 0.0
  %533 = vmatprep.subr.mxu0 0.0
  %534 = vmatpush2.msra.mxu0 0.0
  %535 = vmatprep.subr.mxu0 0.0
  %536 = vmatpush2.msra.mxu0 0.0
  %537 = vmatprep.subr.mxu0 0.0
  %538 = vmatpush2.msra.mxu0 0.0
  %539 = vmatprep.subr.mxu0 0.0
  %540 = vmatpush2.msra.mxu0 0.0
  %541 = vmatprep.subr.mxu0 0.0
  %542 = vmatpush2.msra.mxu0 0.0
  %543 = vmatprep.subr.mxu0 0.0
  %544 = vmatpush2.msra.mxu0 0.0
  %545 = vmatprep.subr.mxu0 0.0
  %546 = vmatpush2.msra.mxu0 0.0
  %547 = vmatprep.subr.mxu0 0.0
  %548 = vmatpush2.msra.mxu0 0.0
  %549 = vmatprep.subr.mxu0 0.0
  %550 = vmatpush2.msra.mxu0 0.0
  %551 = vmatprep.subr.mxu0 0.0
  %552 = vmatpush2.msra.mxu0 0.0
  %553 = vmatprep.subr.mxu0 0.0
  %554 = vmatpush2.msra.mxu0 0.0
  %555 = vmatprep.subr.mxu0 0.0
  %556 = vmatpush2.msra.mxu0 0.0
  %557 = vmatprep.subr.mxu0 0.0
  %558 = vmatpush2.msra.mxu0 0.0
  %559 = vmatprep.subr.mxu0 0.0
  %560 = vmatpush2.msra.mxu0 0.0
  %561 = vmatprep.subr.mxu0 0.0
  %562 = vmatpush2.msra.mxu0 0.0
  %563 = vmatprep.mubr.f32.mxu0 0.0
  %564 = vmatmul.mubr.f32.gmra.mxu0 %v426
  %v565 = vpop.f32.mrf.mxu0
  %v566 = vadd.f32 0.0, %v565
  %v567 = vpop.f32.mrf.mxu0
  %568 = vdwg.mxu0
  %v569 = vsel %vm49, %v495, 0.0
  %v570 = vsel %vm50, %v497, 0.0
  %v571 = vsel %vm51, %v566, 0.0
  %v572 = vrot.slane %v569, 4
  %v573 = vrot.slane %v570, 4
  %v574 = vrot.slane %v571, 4
  %v575 = vadd.f32 %v569, %v572
  %v576 = vadd.f32 %v570, %v573
  %v577 = vadd.f32 %v571, %v574
  %v578 = vadd.f32 %v575, %v576
  %v579 = vadd.f32 %v578, %v577
  %580 = vadd.xlane.f32.xlu0 %v579
  %v581 = vpop.xlane.xlu0 %580
  %v582 = vmul.f32 %v581, 0.001953125
  %v583 = vmul.f32 %v569, %v495
  %v584 = vmul.f32 %v570, %v497
  %v585 = vmul.f32 %v571, %v566
  %v586 = vrot.slane %v583, 4
  %v587 = vrot.slane %v584, 4
  %v588 = vrot.slane %v585, 4
  %v589 = vadd.f32 %v583, %v586
  %v590 = vadd.f32 %v584, %v587
  %v591 = vadd.f32 %v585, %v588
  %v592 = vadd.f32 %v589, %v590
  %v593 = vadd.f32 %v592, %v591
  %594 = vadd.xlane.f32.xlu0 %v593
  %v595 = vpop.xlane.xlu0 %594
  %v596 = vmul.f32 %v595, 0.001953125
  %v597 = vmul.f32 %v582, %v582
  %v598 = vsub.f32 %v596, %v597
  %v599 = vsub.f32 %v495, %v582
  %v600 = vsub.f32 %v497, %v582
  %v601 = vsub.f32 %v566, %v582
  %v602 = vadd.f32 %v598, 1e-05
  %v603 = vrsqrt.pop %v602
  %v604 = vmul.f32 %v599, %v603
  %v605 = vmul.f32 %v600, %v603
  %v606 = vmul.f32 %v601, %v603
  %v607 = vld [vmem:[%s3] sm:$0xff]
  %609 = vset.pattern.permute.xlu0 0
  %610 = vperm.xlu0 %609, %v607
  %v611 = vpop.permute.xlu0 %610
  %v613 = vmul.f32 %v604, %v611
  %v614 = vmul.f32 %v605, %v611
  %v615 = vmul.f32 %v606, %v611
  %616 = vset.pattern.permute.xlu0 1
  %617 = vperm.xlu0 %616, %v607
  %v618 = vpop.permute.xlu0 %617
  %v620 = vadd.f32 %v613, %v618
  %v621 = vadd.f32 %v614, %v618
  %v622 = vadd.f32 %v615, %v618
  %v623 = vmax.f32 %v620, 0.0
  %v624 = vmax.f32 %v621, 0.0
  %v625 = vmax.f32 %v622, 0.0
  %v626 = vsel %vm49, %v623, 0.0
  %v627 = vsel %vm50, %v624, 0.0
  %v628 = vsel %vm51, %v625, 0.0
  %629 = vrot.lane.b32.xlu0 %v623, 126
  %v630 = vpop.permute.xlu0 %629
  %631 = vrot.lane.b32.xlu0 %v624, 126
  %v632 = vpop.permute.xlu0 %631
  %633 = vrot.lane.b32.xlu0 %v625, 126
  %v634 = vpop.permute.xlu0 %633
  %v635 = vsel %vm63, %v632, %v634
  %v636 = vsel %vm63, %v630, %v632
  %v637 = vsel %vm63, %v634, %v630
  %v638 = vsel %vm80, %v636, %v626
  %v639 = vsel %vm81, %v635, %v627
  %v640 = vsel %vm82, %v637, %v628
  %641 = vrot.lane.b32.xlu0 %v623, 2
  %v642 = vpop.permute.xlu0 %641
  %643 = vrot.lane.b32.xlu0 %v624, 2
  %v644 = vpop.permute.xlu0 %643
  %645 = vrot.lane.b32.xlu0 %v625, 2
  %v646 = vpop.permute.xlu0 %645
  %v647 = vsel %vm92, %v644, %v646
  %v648 = vsel %vm92, %v642, %v644
  %v649 = vsel %vm92, %v646, %v642
  %v650 = vsel %vm109, %v649, %v638
  %v651 = vsel %vm110, %v648, %v639
  %v652 = vsel %vm111, %v647, %v640
  %653 = vrot.lane.b32.xlu0 %v623, 92
  %v654 = vpop.permute.xlu0 %653
  %655 = vrot.lane.b32.xlu0 %v624, 92
  %v656 = vpop.permute.xlu0 %655
  %657 = vrot.lane.b32.xlu0 %v625, 92
  %v658 = vpop.permute.xlu0 %657
  %v659 = vsel %vm121, %v656, %v658
  %v660 = vsel %vm121, %v654, %v656
  %v661 = vsel %vm121, %v658, %v654
  %v662 = vsel %vm138, %v660, %v650
  %v663 = vsel %vm139, %v659, %v651
  %v664 = vsel %vm140, %v661, %v652
  %665 = vrot.lane.b32.xlu0 %v623, 90
  %v666 = vpop.permute.xlu0 %665
  %667 = vrot.lane.b32.xlu0 %v624, 90
  %v668 = vpop.permute.xlu0 %667
  %669 = vrot.lane.b32.xlu0 %v625, 90
  %v670 = vpop.permute.xlu0 %669
  %v671 = vsel %vm150, %v668, %v670
  %v672 = vsel %vm150, %v666, %v668
  %v673 = vsel %vm150, %v670, %v666
  %v674 = vsel %vm167, %v672, %v662
  %v675 = vsel %vm168, %v671, %v663
  %v676 = vsel %vm169, %v673, %v664
  %677 = vrot.lane.b32.xlu0 %v623, 94
  %v678 = vpop.permute.xlu0 %677
  %679 = vrot.lane.b32.xlu0 %v624, 94
  %v680 = vpop.permute.xlu0 %679
  %681 = vrot.lane.b32.xlu0 %v625, 94
  %v682 = vpop.permute.xlu0 %681
  %v683 = vsel %vm179, %v680, %v682
  %v684 = vsel %vm179, %v678, %v680
  %v685 = vsel %vm179, %v682, %v678
  %v686 = vsel %vm196, %v684, %v674
  %v687 = vsel %vm197, %v683, %v675
  %v688 = vsel %vm198, %v685, %v676
  %689 = vrot.lane.b32.xlu0 %v623, 36
  %v690 = vpop.permute.xlu0 %689
  %691 = vrot.lane.b32.xlu0 %v624, 36
  %v692 = vpop.permute.xlu0 %691
  %693 = vrot.lane.b32.xlu0 %v625, 36
  %v694 = vpop.permute.xlu0 %693
  %v695 = vsel %vm208, %v692, %v694
  %v696 = vsel %vm208, %v690, %v692
  %v697 = vsel %vm208, %v694, %v690
  %v698 = vsel %vm225, %v697, %v686
  %v699 = vsel %vm226, %v696, %v687
  %v700 = vsel %vm227, %v695, %v688
  %701 = vrot.lane.b32.xlu0 %v623, 34
  %v702 = vpop.permute.xlu0 %701
  %703 = vrot.lane.b32.xlu0 %v624, 34
  %v704 = vpop.permute.xlu0 %703
  %705 = vrot.lane.b32.xlu0 %v625, 34
  %v706 = vpop.permute.xlu0 %705
  %v707 = vsel %vm237, %v704, %v706
  %v708 = vsel %vm237, %v702, %v704
  %v709 = vsel %vm237, %v706, %v702
  %v710 = vsel %vm254, %v709, %v698
  %v711 = vsel %vm255, %v708, %v699
  %v712 = vsel %vm256, %v707, %v700
  %713 = vrot.lane.b32.xlu0 %v623, 38
  %v714 = vpop.permute.xlu0 %713
  %715 = vrot.lane.b32.xlu0 %v624, 38
  %v716 = vpop.permute.xlu0 %715
  %717 = vrot.lane.b32.xlu0 %v625, 38
  %v718 = vpop.permute.xlu0 %717
  %v719 = vsel %vm266, %v716, %v718
  %v720 = vsel %vm266, %v714, %v716
  %v721 = vsel %vm266, %v718, %v714
  %v722 = vsel %vm283, %v721, %v710
  %v723 = vsel %vm284, %v720, %v711
  %v724 = vsel %vm285, %v719, %v712
  %725 = vrot.lane.b32.xlu0 %v722, 19
  %v726 = vpop.permute.xlu0 %725
  %727 = vrot.lane.b32.xlu0 %v723, 19
  %v728 = vpop.permute.xlu0 %727
  %729 = vrot.lane.b32.xlu0 %v724, 19
  %v730 = vpop.permute.xlu0 %729
  %v731 = vsel %vm295, %v728, %v730
  %v732 = vsel %vm295, %v726, %v728
  %v733 = vsel %vm295, %v730, %v726
  %734 = vst [vmem:[#allocation2] sm:$0xff] %v733
  %735 = vst [vmem:[#allocation2 + $0x8] sm:$0xff] %v732
  %736 = vst [vmem:[#allocation2 + $0x10] sm:$0xff] %v731
  %737 = vrot.lane.b32.xlu0 %v722, 18
  %v738 = vpop.permute.xlu0 %737
  %739 = vrot.lane.b32.xlu0 %v723, 18
  %v740 = vpop.permute.xlu0 %739
  %741 = vrot.lane.b32.xlu0 %v724, 18
  %v742 = vpop.permute.xlu0 %741
  %v743 = vsel %vm308, %v740, %v742
  %v744 = vsel %vm308, %v738, %v740
  %v745 = vsel %vm308, %v742, %v738
  %746 = vst [vmem:[#allocation2 + $0x18] sm:$0xff] %v745
  %747 = vst [vmem:[#allocation2 + $0x20] sm:$0xff] %v744
  %748 = vst [vmem:[#allocation2 + $0x28] sm:$0xff] %v743
  %749 = vrot.lane.b32.xlu0 %v722, 17
  %v750 = vpop.permute.xlu0 %749
  %751 = vrot.lane.b32.xlu0 %v723, 17
  %v752 = vpop.permute.xlu0 %751
  %753 = vrot.lane.b32.xlu0 %v724, 17
  %v754 = vpop.permute.xlu0 %753
  %v755 = vsel %vm321, %v752, %v754
  %v756 = vsel %vm321, %v750, %v752
  %v757 = vsel %vm321, %v754, %v750
  %758 = vst [vmem:[#allocation2 + $0x30] sm:$0xff] %v757
  %759 = vst [vmem:[#allocation2 + $0x38] sm:$0xff] %v756
  %760 = vst [vmem:[#allocation2 + $0x40] sm:$0xff] %v755
  %761 = vrot.lane.b32.xlu0 %v722, 1
  %v762 = vpop.permute.xlu0 %761
  %763 = vrot.lane.b32.xlu0 %v723, 1
  %v764 = vpop.permute.xlu0 %763
  %765 = vrot.lane.b32.xlu0 %v724, 1
  %v766 = vpop.permute.xlu0 %765
  %v767 = vsel %vm334, %v764, %v766
  %v768 = vsel %vm334, %v762, %v764
  %v769 = vsel %vm334, %v766, %v762
  %770 = vst [vmem:[#allocation2 + $0x48] sm:$0xff] %v769
  %771 = vst [vmem:[#allocation2 + $0x50] sm:$0xff] %v768
  %772 = vst [vmem:[#allocation2 + $0x58] sm:$0xff] %v767
  %773 = vst [vmem:[#allocation2 + $0x60] sm:$0xff] %v722
  %774 = vst [vmem:[#allocation2 + $0x68] sm:$0xff] %v723
  %775 = vst [vmem:[#allocation2 + $0x70] sm:$0xff] %v724
  %776 = vrot.lane.b32.xlu0 %v722, 127
  %v777 = vpop.permute.xlu0 %776
  %778 = vrot.lane.b32.xlu0 %v723, 127
  %v779 = vpop.permute.xlu0 %778
  %780 = vrot.lane.b32.xlu0 %v724, 127
  %v781 = vpop.permute.xlu0 %780
  %v782 = vsel %vm350, %v779, %v781
  %v783 = vsel %vm350, %v777, %v779
  %v784 = vsel %vm350, %v781, %v777
  %785 = vst [vmem:[#allocation2 + $0x78] sm:$0xff] %v783
  %786 = vst [vmem:[#allocation2 + $0x80] sm:$0xff] %v782
  %787 = vst [vmem:[#allocation2 + $0x88] sm:$0xff] %v784
  %788 = vrot.lane.b32.xlu0 %v722, 111
  %v789 = vpop.permute.xlu0 %788
  %790 = vrot.lane.b32.xlu0 %v723, 111
  %v791 = vpop.permute.xlu0 %790
  %792 = vrot.lane.b32.xlu0 %v724, 111
  %v793 = vpop.permute.xlu0 %792
  %v794 = vsel %vm363, %v791, %v793
  %v795 = vsel %vm363, %v789, %v791
  %v796 = vsel %vm363, %v793, %v789
  %797 = vst [vmem:[#allocation2 + $0x90] sm:$0xff] %v795
  %798 = vst [vmem:[#allocation2 + $0x98] sm:$0xff] %v794
  %799 = vst [vmem:[#allocation2 + $0xa0] sm:$0xff] %v796
  %800 = vrot.lane.b32.xlu0 %v722, 110
  %v801 = vpop.permute.xlu0 %800
  %802 = vrot.lane.b32.xlu0 %v723, 110
  %v803 = vpop.permute.xlu0 %802
  %804 = vrot.lane.b32.xlu0 %v724, 110
  %v805 = vpop.permute.xlu0 %804
  %v806 = vsel %vm376, %v803, %v805
  %v807 = vsel %vm376, %v801, %v803
  %v808 = vsel %vm376, %v805, %v801
  %809 = vst [vmem:[#allocation2 + $0xa8] sm:$0xff] %v807
  %810 = vst [vmem:[#allocation2 + $0xb0] sm:$0xff] %v806
  %811 = vst [vmem:[#allocation2 + $0xb8] sm:$0xff] %v808
  %812 = vrot.lane.b32.xlu0 %v722, 109
  %v813 = vpop.permute.xlu0 %812
  %814 = vrot.lane.b32.xlu0 %v723, 109
  %v815 = vpop.permute.xlu0 %814
  %816 = vrot.lane.b32.xlu0 %v724, 109
  %v817 = vpop.permute.xlu0 %816
  %v818 = vsel %vm389, %v815, %v817
  %v819 = vsel %vm389, %v813, %v815
  %v820 = vsel %vm389, %v817, %v813
  %821 = vst [vmem:[#allocation2 + $0xc0] sm:$0xff] %v819
  %822 = vst [vmem:[#allocation2 + $0xc8] sm:$0xff] %v818
  %823 = vst [vmem:[#allocation2 + $0xd0] sm:$0xff] %v820
  %v824 = vld [vmem:[%s4] sm:$0xff]
  %v825 = vld [vmem:[#allocation2] sm:$0xff]
  %v826 = vld [vmem:[#allocation2 + $0x8] sm:$0xff]
  %v827 = vld [vmem:[#allocation2 + $0x10] sm:$0xff]
  %v828 = vld [vmem:[#allocation2 + $0x18] sm:$0xff]
  %v829 = vld [vmem:[#allocation2 + $0x20] sm:$0xff]
  %v830 = vld [vmem:[#allocation2 + $0x28] sm:$0xff]
  %v831 = vld [vmem:[#allocation2 + $0x30] sm:$0xff]
  %v832 = vld [vmem:[#allocation2 + $0x38] sm:$0xff]
  %v833 = vld [vmem:[#allocation2 + $0x40] sm:$0xff]
  %v834 = vld [vmem:[#allocation2 + $0x48] sm:$0xff]
  %v835 = vld [vmem:[#allocation2 + $0x50] sm:$0xff]
  %v836 = vld [vmem:[#allocation2 + $0x58] sm:$0xff]
  %v837 = vld [vmem:[#allocation2 + $0x60] sm:$0xff]
  %v838 = vld [vmem:[#allocation2 + $0x68] sm:$0xff]
  %v839 = vld [vmem:[#allocation2 + $0x70] sm:$0xff]
  %v840 = vld [vmem:[#allocation2 + $0x78] sm:$0xff]
  %v841 = vld [vmem:[#allocation2 + $0x80] sm:$0xff]
  %v842 = vld [vmem:[#allocation2 + $0x88] sm:$0xff]
  %v843 = vld [vmem:[#allocation2 + $0x90] sm:$0xff]
  %v844 = vld [vmem:[#allocation2 + $0x98] sm:$0xff]
  %v845 = vld [vmem:[#allocation2 + $0xa0] sm:$0xff]
  %v846 = vld [vmem:[#allocation2 + $0xa8] sm:$0xff]
  %v847 = vld [vmem:[#allocation2 + $0xb0] sm:$0xff]
  %v848 = vld [vmem:[#allocation2 + $0xb8] sm:$0xff]
  %v849 = vld [vmem:[#allocation2 + $0xc0] sm:$0xff]
  %v850 = vld [vmem:[#allocation2 + $0xc8] sm:$0xff]
  %v851 = vld [vmem:[#allocation2 + $0xd0] sm:$0xff]
  %v853 = vsel %vm424, %v824, 0
  %855 = vmatprep.subr.mxu0 0.0
  %856 = vmatpush1.msra.mxu0 0.0
  %857 = vmatprep.subr.mxu0 0.0
  %858 = vmatpush1.msra.mxu0 0.0
  %859 = vmatprep.subr.mxu0 0.0
  %860 = vmatpush1.msra.mxu0 0.0
  %861 = vmatprep.subr.mxu0 0.0
  %862 = vmatpush1.msra.mxu0 0.0
  %863 = vmatprep.subr.mxu0 0.0
  %864 = vmatpush1.msra.mxu0 0.0
  %865 = vmatprep.subr.mxu0 0.0
  %866 = vmatpush1.msra.mxu0 0.0
  %867 = vmatprep.subr.mxu0 0.0
  %868 = vmatpush1.msra.mxu0 0.0
  %869 = vmatprep.subr.mxu0 %v850
  %870 = vmatpush1.msra.mxu0 %v849
  %871 = vmatprep.subr.mxu0 %v847
  %872 = vmatpush1.msra.mxu0 %v846
  %873 = vmatprep.subr.mxu0 %v844
  %874 = vmatpush1.msra.mxu0 %v843
  %875 = vmatprep.subr.mxu0 %v841
  %876 = vmatpush1.msra.mxu0 %v840
  %877 = vmatprep.subr.mxu0 %v838
  %878 = vmatpush1.msra.mxu0 %v837
  %879 = vmatprep.subr.mxu0 %v835
  %880 = vmatpush1.msra.mxu0 %v834
  %881 = vmatprep.subr.mxu0 %v832
  %882 = vmatpush1.msra.mxu0 %v831
  %883 = vmatprep.subr.mxu0 %v829
  %884 = vmatpush1.msra.mxu0 %v828
  %885 = vmatprep.subr.mxu0 %v826
  %886 = vmatpush1.msra.mxu0 %v825
  %887 = vmatprep.subr.mxu0 0.0
  %888 = vmatpush2.msra.mxu0 0.0
  %889 = vmatprep.subr.mxu0 0.0
  %890 = vmatpush2.msra.mxu0 0.0
  %891 = vmatprep.subr.mxu0 0.0
  %892 = vmatpush2.msra.mxu0 0.0
  %893 = vmatprep.subr.mxu0 0.0
  %894 = vmatpush2.msra.mxu0 0.0
  %895 = vmatprep.subr.mxu0 0.0
  %896 = vmatpush2.msra.mxu0 0.0
  %897 = vmatprep.subr.mxu0 0.0
  %898 = vmatpush2.msra.mxu0 0.0
  %899 = vmatprep.subr.mxu0 0.0
  %900 = vmatpush2.msra.mxu0 0.0
  %901 = vmatprep.subr.mxu0 0.0
  %902 = vmatpush2.msra.mxu0 0.0
  %903 = vmatprep.subr.mxu0 0.0
  %904 = vmatpush2.msra.mxu0 0.0
  %905 = vmatprep.subr.mxu0 0.0
  %906 = vmatpush2.msra.mxu0 0.0
  %907 = vmatprep.subr.mxu0 0.0
  %908 = vmatpush2.msra.mxu0 0.0
  %909 = vmatprep.subr.mxu0 0.0
  %910 = vmatpush2.msra.mxu0 0.0
  %911 = vmatprep.subr.mxu0 0.0
  %912 = vmatpush2.msra.mxu0 0.0
  %913 = vmatprep.subr.mxu0 0.0
  %914 = vmatpush2.msra.mxu0 0.0
  %915 = vmatprep.subr.mxu0 0.0
  %916 = vmatpush2.msra.mxu0 0.0
  %917 = vmatprep.subr.mxu0 0.0
  %918 = vmatpush2.msra.mxu0 0.0
  %919 = vmatprep.mubr.f32.mxu0 0.0
  %920 = vmatmul.mubr.f32.gmra.mxu0 %v853
  %v921 = vpop.f32.mrf.mxu0
  %v922 = vadd.f32 0.0, %v921
  %v923 = vpop.f32.mrf.mxu0
  %v924 = vadd.f32 0.0, %v923
  %925 = vdwg.mxu0
  %926 = vmatprep.subr.mxu0 0.0
  %927 = vmatpush1.msra.mxu0 0.0
  %928 = vmatprep.subr.mxu0 0.0
  %929 = vmatpush1.msra.mxu0 0.0
  %930 = vmatprep.subr.mxu0 0.0
  %931 = vmatpush1.msra.mxu0 0.0
  %932 = vmatprep.subr.mxu0 0.0
  %933 = vmatpush1.msra.mxu0 0.0
  %934 = vmatprep.subr.mxu0 0.0
  %935 = vmatpush1.msra.mxu0 0.0
  %936 = vmatprep.subr.mxu0 0.0
  %937 = vmatpush1.msra.mxu0 0.0
  %938 = vmatprep.subr.mxu0 0.0
  %939 = vmatpush1.msra.mxu0 0.0
  %940 = vmatprep.subr.mxu0 0.0
  %941 = vmatpush1.msra.mxu0 %v851
  %942 = vmatprep.subr.mxu0 0.0
  %943 = vmatpush1.msra.mxu0 %v848
  %944 = vmatprep.subr.mxu0 0.0
  %945 = vmatpush1.msra.mxu0 %v845
  %946 = vmatprep.subr.mxu0 0.0
  %947 = vmatpush1.msra.mxu0 %v842
  %948 = vmatprep.subr.mxu0 0.0
  %949 = vmatpush1.msra.mxu0 %v839
  %950 = vmatprep.subr.mxu0 0.0
  %951 = vmatpush1.msra.mxu0 %v836
  %952 = vmatprep.subr.mxu0 0.0
  %953 = vmatpush1.msra.mxu0 %v833
  %954 = vmatprep.subr.mxu0 0.0
  %955 = vmatpush1.msra.mxu0 %v830
  %956 = vmatprep.subr.mxu0 0.0
  %957 = vmatpush1.msra.mxu0 %v827
  %958 = vmatprep.subr.mxu0 0.0
  %959 = vmatpush2.msra.mxu0 0.0
  %960 = vmatprep.subr.mxu0 0.0
  %961 = vmatpush2.msra.mxu0 0.0
  %962 = vmatprep.subr.mxu0 0.0
  %963 = vmatpush2.msra.mxu0 0.0
  %964 = vmatprep.subr.mxu0 0.0
  %965 = vmatpush2.msra.mxu0 0.0
  %966 = vmatprep.subr.mxu0 0.0
  %967 = vmatpush2.msra.mxu0 0.0
  %968 = vmatprep.subr.mxu0 0.0
  %969 = vmatpush2.msra.mxu0 0.0
  %970 = vmatprep.subr.mxu0 0.0
  %971 = vmatpush2.msra.mxu0 0.0
  %972 = vmatprep.subr.mxu0 0.0
  %973 = vmatpush2.msra.mxu0 0.0
  %974 = vmatprep.subr.mxu0 0.0
  %975 = vmatpush2.msra.mxu0 0.0
  %976 = vmatprep.subr.mxu0 0.0
  %977 = vmatpush2.msra.mxu0 0.0
  %978 = vmatprep.subr.mxu0 0.0
  %979 = vmatpush2.msra.mxu0 0.0
  %980 = vmatprep.subr.mxu0 0.0
  %981 = vmatpush2.msra.mxu0 0.0
  %982 = vmatprep.subr.mxu0 0.0
  %983 = vmatpush2.msra.mxu0 0.0
  %984 = vmatprep.subr.mxu0 0.0
  %985 = vmatpush2.msra.mxu0 0.0
  %986 = vmatprep.subr.mxu0 0.0
  %987 = vmatpush2.msra.mxu0 0.0
  %988 = vmatprep.subr.mxu0 0.0
  %989 = vmatpush2.msra.mxu0 0.0
  %990 = vmatprep.mubr.f32.mxu0 0.0
  %991 = vmatmul.mubr.f32.gmra.mxu0 %v853
  %v992 = vpop.f32.mrf.mxu0
  %v993 = vadd.f32 0.0, %v992
  %v994 = vpop.f32.mrf.mxu0
  %995 = vdwg.mxu0
  %v996 = vsel %vm49, %v922, 0.0
  %v997 = vsel %vm50, %v924, 0.0
  %v998 = vsel %vm51, %v993, 0.0
  %v999 = vrot.slane %v996, 4
  %v1000 = vrot.slane %v997, 4
  %v1001 = vrot.slane %v998, 4
  %v1002 = vadd.f32 %v996, %v999
  %v1003 = vadd.f32 %v997, %v1000
  %v1004 = vadd.f32 %v998, %v1001
  %v1005 = vadd.f32 %v1002, %v1003
  %v1006 = vadd.f32 %v1005, %v1004
  %1007 = vadd.xlane.f32.xlu0 %v1006
  %v1008 = vpop.xlane.xlu0 %1007
  %v1009 = vmul.f32 %v1008, 0.001953125
  %v1010 = vmul.f32 %v996, %v922
  %v1011 = vmul.f32 %v997, %v924
  %v1012 = vmul.f32 %v998, %v993
  %v1013 = vrot.slane %v1010, 4
  %v1014 = vrot.slane %v1011, 4
  %v1015 = vrot.slane %v1012, 4
  %v1016 = vadd.f32 %v1010, %v1013
  %v1017 = vadd.f32 %v1011, %v1014
  %v1018 = vadd.f32 %v1012, %v1015
  %v1019 = vadd.f32 %v1016, %v1017
  %v1020 = vadd.f32 %v1019, %v1018
  %1021 = vadd.xlane.f32.xlu0 %v1020
  %v1022 = vpop.xlane.xlu0 %1021
  %v1023 = vmul.f32 %v1022, 0.001953125
  %v1024 = vmul.f32 %v1009, %v1009
  %v1025 = vsub.f32 %v1023, %v1024
  %v1026 = vsub.f32 %v922, %v1009
  %v1027 = vsub.f32 %v924, %v1009
  %v1028 = vsub.f32 %v993, %v1009
  %v1029 = vadd.f32 %v1025, 1e-05
  %v1030 = vrsqrt.pop %v1029
  %v1031 = vmul.f32 %v1026, %v1030
  %v1032 = vmul.f32 %v1027, %v1030
  %v1033 = vmul.f32 %v1028, %v1030
  %v1034 = vld [vmem:[%s5] sm:$0xff]
  %1036 = vset.pattern.permute.xlu0 0
  %1037 = vperm.xlu0 %1036, %v1034
  %v1038 = vpop.permute.xlu0 %1037
  %v1040 = vmul.f32 %v1031, %v1038
  %v1041 = vmul.f32 %v1032, %v1038
  %v1042 = vmul.f32 %v1033, %v1038
  %1043 = vset.pattern.permute.xlu0 1
  %1044 = vperm.xlu0 %1043, %v1034
  %v1045 = vpop.permute.xlu0 %1044
  %v1047 = vadd.f32 %v1040, %v1045
  %v1048 = vadd.f32 %v1041, %v1045
  %v1049 = vadd.f32 %v1042, %v1045
  %v1050 = vadd.f32 %v33, %v1047
  %v1051 = vadd.f32 %v34, %v1048
  %v1052 = vadd.f32 %v35, %v1049
  %1053 = vst [vmem:[%s6] sm:$0xff] %v1050
  %1054 = vst [vmem:[%s6 + $0x8] sm:$0xff] %v1051
  %1055 = vst [vmem:[%s6 + $0x10] sm:$0xff] %v1052
  // Predicated region
  $region26: #{res_block.1} parent=0 // pred_check
    _
  $region27: #{res_block.1} parent=0 // pred_check_branch
    %1057 = sbr.rel (0) target = $region29
  $region28: #{res_block.1} parent=0 // pred_region
    _
  $region29: #{res_block.1} parent=0 // pred_fallthru
    _
  // Predicated region
  $region30: #{res_block.1} parent=0 // pred_check
    _
  $region31: #{res_block.1} parent=0 // pred_check_branch
    %1059 = sbr.rel (0) target = $region33
  $region32: #{res_block.1} parent=0 // pred_region
    _
  $region33: #{res_block.1} parent=0 // pred_fallthru
    _

</llo_original>
